<compile_context>
chip_gen: v7x
topology: tpu7x:2x2x1
jax: 0.10.0
libtpu: 0.0.40
codegen_flags: <defaults>
</compile_context>

<pallas_src>
import functools

import jax
import jax.numpy as jnp
from jax import lax
from jax.experimental import pallas as pl
from jax.experimental.pallas import tpu as pltpu


def _layer_norm(v, gamma, beta, eps=1e-5):
    """PyTorch LayerNorm over the last dim (biased variance, eps=1e-5)."""
    mu = jnp.mean(v, axis=-1, keepdims=True)
    var = jnp.mean(jnp.square(v - mu), axis=-1, keepdims=True)
    return (v - mu) * lax.rsqrt(var + eps) * gamma + beta


def context_embed_kernel(x_ref,
                         wqkv_ref, bqkv_ref, wo_ref, bo_ref,
                         w1_ref, b1_ref, w2_ref, b2_ref,
                         g1_ref, be1_ref, g2_ref, be2_ref,
                         out_ref, *, batch, seq, num_heads):
    """Single grid step. x_ref/out_ref: (B*T, E) resident in VMEM."""
    x = x_ref[...]                                  # (B*T, E)
    E = x.shape[-1]
    hd = E // num_heads
    scale = 1.0 / float(hd) ** 0.5                  # PyTorch scales by 1/sqrt(head_dim)

    # ---- fused QKV projection: one (B*T,E) x (E,3E) matmul -----------------
    qkv = jnp.dot(x, wqkv_ref[...], preferred_element_type=jnp.float32) + bqkv_ref[...]
    q = qkv[:, :E]
    k = qkv[:, E:2 * E]
    v = qkv[:, 2 * E:]

    # ---- per-(batch, head) softmax attention (small static loop) ----------
    # Head outputs are concatenated back into a lane-contiguous (B*T, E) slab
    # so the output projection is a single matmul below.
    batch_rows = []
    for b in range(batch):                          # static unroll (B small)
        r0 = b * seq
        head_outs = []
        for h in range(num_heads):                  # static unroll (2 heads)
            lo = h * hd
            qh = q[r0:r0 + seq, lo:lo + hd]
            kh = k[r0:r0 + seq, lo:lo + hd]
            vh = v[r0:r0 + seq, lo:lo + hd]
            s = jnp.dot(qh, kh.T, preferred_element_type=jnp.float32) * scale  # (T, T)
            s = s - jnp.max(s, axis=-1, keepdims=True)
            p = jnp.exp(s)
            denom = jnp.sum(p, axis=-1, keepdims=True)
            p = p * pl.reciprocal(denom, approx=True)        # EUP slot (free here)
            head_outs.append(jnp.dot(p, vh, preferred_element_type=jnp.float32))
        batch_rows.append(jnp.concatenate(head_outs, axis=-1))      # (T, E)
    attn_o = jnp.concatenate(batch_rows, axis=0)                    # (B*T, E)

    # ---- single output projection ------------------------------------------
    attn = jnp.dot(attn_o, wo_ref[...], preferred_element_type=jnp.float32) + bo_ref[...]

    # ---- residual + LayerNorm 1 --------------------------------------------
    x1 = _layer_norm(x + attn, g1_ref[...], be1_ref[...])

    # ---- MLP: Linear(E, ff) -> ReLU -> Linear(ff, E) ------------------------
    h1 = jnp.maximum(
        jnp.dot(x1, w1_ref[...], preferred_element_type=jnp.float32) + b1_ref[...], 0.0)
    mlp = jnp.dot(h1, w2_ref[...], preferred_element_type=jnp.float32) + b2_ref[...]

    # ---- residual + LayerNorm 2 --------------------------------------------
    out_ref[...] = _layer_norm(x1 + mlp, g2_ref[...], be2_ref[...])


def context_embed_forward(x, params, num_heads=2):
    """x: (B, T, latent_dim) float32 (batch_first). Returns (B, T, latent_dim)."""
    B, T, E = x.shape
    x2d = x.reshape(B * T, E)                       # bitcast-level reshape in the wrapper
    kernel = functools.partial(context_embed_kernel,
                               batch=B, seq=T, num_heads=num_heads)
    vmem = pl.BlockSpec(memory_space=pltpu.MemorySpace.VMEM)

    out2d = pl.pallas_call(
        kernel,
        out_shape=jax.ShapeDtypeStruct((B * T, E), jnp.float32),
        in_specs=[vmem] * 13,
        out_specs=vmem,
        # grid=() : whole problem in one step -> no per-step pipeline overhead.
    )(
        x2d,
        params["wqkv"], params["bqkv"], params["wo"], params["bo"],
        params["w1"], params["b1"], params["w2"], params["b2"],
        params["g1"], params["be1"], params["g2"], params["be2"],
    )
    return out2d.reshape(B, T, E)


def reference_forward(x, params, num_heads=2):
    """Pure-JAX reference of the same math (mirrors torch module semantics)."""
    B, T, E = x.shape
    hd = E // num_heads
    scale = 1.0 / float(hd) ** 0.5

    qkv = x @ params["wqkv"] + params["bqkv"][0]
    q, k, v = qkv[..., :E], qkv[..., E:2 * E], qkv[..., 2 * E:]

    def heads(a):
        return a.reshape(B, T, num_heads, hd).transpose(0, 2, 1, 3)   # (B, H, T, hd)

    qh, kh, vh = heads(q), heads(k), heads(v)
    s = jnp.einsum("bhtd,bhsd->bhts", qh, kh) * scale
    p = jax.nn.softmax(s, axis=-1)
    o = jnp.einsum("bhts,bhsd->bhtd", p, vh)
    o = o.transpose(0, 2, 1, 3).reshape(B, T, E)
    attn = o @ params["wo"] + params["bo"][0]

    x1 = _layer_norm(x + attn, params["g1"][0], params["be1"][0])
    h1 = jnp.maximum(x1 @ params["w1"] + params["b1"][0], 0.0)
    mlp = h1 @ params["w2"] + params["b2"][0]
    return _layer_norm(x1 + mlp, params["g2"][0], params["be2"][0])


def init_params(key, latent_dim, ff_dim):
    """Deterministic synthetic parameters (kernel layout: weights are (in, out))."""
    ks = jax.random.split(key, 8)
    be = 1.0 / latent_dim ** 0.5
    bf = 1.0 / ff_dim ** 0.5

    def u(k, shape, bound):
        return jax.random.uniform(k, shape, jnp.float32, -bound, bound)

    return dict(
        # attention in_proj (Q|K|V fused) and out_proj
        wqkv=u(ks[0], (latent_dim, 3 * latent_dim), be),
        bqkv=u(ks[1], (1, 3 * latent_dim), be),
        wo=u(ks[2], (latent_dim, latent_dim), be),
        bo=u(ks[3], (1, latent_dim), be),
        # MLP
        w1=u(ks[4], (latent_dim, ff_dim), be),
        b1=u(ks[5], (1, ff_dim), be),
        w2=u(ks[6], (ff_dim, latent_dim), bf),
        b2=u(ks[7], (1, latent_dim), bf),
        # LayerNorms (PyTorch default init: gamma=1, beta=0)
        g1=jnp.ones((1, latent_dim), jnp.float32),
        be1=jnp.zeros((1, latent_dim), jnp.float32),
        g2=jnp.ones((1, latent_dim), jnp.float32),
        be2=jnp.zeros((1, latent_dim), jnp.float32),
    )


if __name__ == "__main__":
    LATENT_DIM = 32   # latent_dim (divisible by num_heads=2)
    FF_DIM = 64       # ff_dim default
    NUM_HEADS = 2
    BATCH = 2
    SEQ = 8

    key = jax.random.PRNGKey(0)
    kx, kp = jax.random.split(key)
    x = jax.random.normal(kx, (BATCH, SEQ, LATENT_DIM), jnp.float32)
    params = init_params(kp, LATENT_DIM, FF_DIM)

    out = jax.jit(functools.partial(context_embed_forward, num_heads=NUM_HEADS))(x, params)
    jax.block_until_ready(out)

    ref = reference_forward(x, params, num_heads=NUM_HEADS)

    assert out.shape == (BATCH, SEQ, LATENT_DIM)
    assert bool(jnp.all(jnp.isfinite(out)))
    max_err = float(jnp.max(jnp.abs(out - ref)))
    assert max_err < 1e-3, f"kernel/reference mismatch: max_err={max_err}"
    print("KERNEL_OK")
</pallas_src>

<mosaic_0001>
module attributes {stable_mosaic.version = 11 : i64} {
  func.func @context_embed_kernel(%arg0: memref<16x32xf32, #tpu.memory_space<vmem>>, %arg1: memref<32x96xf32, #tpu.memory_space<vmem>>, %arg2: memref<1x96xf32, #tpu.memory_space<vmem>>, %arg3: memref<32x32xf32, #tpu.memory_space<vmem>>, %arg4: memref<1x32xf32, #tpu.memory_space<vmem>>, %arg5: memref<32x64xf32, #tpu.memory_space<vmem>>, %arg6: memref<1x64xf32, #tpu.memory_space<vmem>>, %arg7: memref<64x32xf32, #tpu.memory_space<vmem>>, %arg8: memref<1x32xf32, #tpu.memory_space<vmem>>, %arg9: memref<1x32xf32, #tpu.memory_space<vmem>>, %arg10: memref<1x32xf32, #tpu.memory_space<vmem>>, %arg11: memref<1x32xf32, #tpu.memory_space<vmem>>, %arg12: memref<1x32xf32, #tpu.memory_space<vmem>>, %arg13: memref<16x32xf32, #tpu.memory_space<vmem>>) attributes {dimension_semantics = [], scalar_prefetch = 0 : i64, scratch_operands = 0 : i64, tpu.core_type = #tpu.core_type<tc>} {
    %c0 = arith.constant 0 : index
    %c0_0 = arith.constant 0 : index
    %0 = vector.load %arg0[%c0, %c0_0] : memref<16x32xf32, #tpu.memory_space<vmem>>, vector<16x32xf32>
    %c0_1 = arith.constant 0 : index
    %c0_2 = arith.constant 0 : index
    %1 = vector.load %arg1[%c0_1, %c0_2] : memref<32x96xf32, #tpu.memory_space<vmem>>, vector<32x96xf32>
    %cst = arith.constant dense<0.000000e+00> : vector<16x96xf32>
    %2 = tpu.matmul %0, %1, %cst {dimension_numbers = #tpu.dot_dimension_numbers<[1], [0], [0], [1], [0, 0, 1, 1], [], []>} : vector<16x32xf32>, vector<32x96xf32>, vector<16x96xf32> -> vector<16x96xf32>
    %c0_3 = arith.constant 0 : index
    %c0_4 = arith.constant 0 : index
    %3 = vector.load %arg2[%c0_3, %c0_4] : memref<1x96xf32, #tpu.memory_space<vmem>>, vector<1x96xf32>
    %4 = vector.broadcast %3 : vector<1x96xf32> to vector<16x96xf32>
    %5 = arith.addf %2, %4 : vector<16x96xf32>
    %6 = vector.extract_strided_slice %5 {offsets = [0, 0], sizes = [16, 32], strides = [1, 1]} : vector<16x96xf32> to vector<16x32xf32>
    %7 = vector.extract_strided_slice %5 {offsets = [0, 32], sizes = [16, 32], strides = [1, 1]} : vector<16x96xf32> to vector<16x32xf32>
    %8 = vector.extract_strided_slice %5 {offsets = [0, 64], sizes = [16, 32], strides = [1, 1]} : vector<16x96xf32> to vector<16x32xf32>
    %9 = vector.extract_strided_slice %6 {offsets = [0, 0], sizes = [8, 16], strides = [1, 1]} : vector<16x32xf32> to vector<8x16xf32>
    %10 = vector.extract_strided_slice %7 {offsets = [0, 0], sizes = [8, 16], strides = [1, 1]} : vector<16x32xf32> to vector<8x16xf32>
    %11 = vector.extract_strided_slice %8 {offsets = [0, 0], sizes = [8, 16], strides = [1, 1]} : vector<16x32xf32> to vector<8x16xf32>
    %12 = tpu.transpose %10, [1, 0] : vector<8x16xf32> -> vector<16x8xf32>
    %cst_5 = arith.constant dense<0.000000e+00> : vector<8x8xf32>
    %13 = tpu.matmul %9, %12, %cst_5 {dimension_numbers = #tpu.dot_dimension_numbers<[1], [0], [0], [1], [0, 0, 1, 1], [], []>} : vector<8x16xf32>, vector<16x8xf32>, vector<8x8xf32> -> vector<8x8xf32>
    %cst_6 = arith.constant 2.500000e-01 : f32
    %14 = vector.broadcast %cst_6 : f32 to vector<8x8xf32>
    %15 = arith.mulf %13, %14 : vector<8x8xf32>
    %cst_7 = arith.constant dense<0xFF800000> : vector<8xf32>
    %16 = vector.multi_reduction <maximumf>, %15, %cst_7 [1] : vector<8x8xf32> to vector<8xf32>
    %17 = vector.shape_cast %16 : vector<8xf32> to vector<8x1xf32>
    %18 = vector.broadcast %17 : vector<8x1xf32> to vector<8x8xf32>
    %19 = arith.subf %15, %18 : vector<8x8xf32>
    %20 = math.exp %19 : vector<8x8xf32>
    %cst_8 = arith.constant dense<0.000000e+00> : vector<8xf32>
    %21 = vector.multi_reduction <add>, %20, %cst_8 [1] : vector<8x8xf32> to vector<8xf32>
    %22 = vector.shape_cast %21 : vector<8xf32> to vector<8x1xf32>
    %23 = tpu.reciprocal %22 {approx = true} : vector<8x1xf32> -> vector<8x1xf32>
    %24 = vector.broadcast %23 : vector<8x1xf32> to vector<8x8xf32>
    %25 = arith.mulf %20, %24 : vector<8x8xf32>
    %cst_9 = arith.constant dense<0.000000e+00> : vector<8x16xf32>
    %26 = tpu.matmul %25, %11, %cst_9 {dimension_numbers = #tpu.dot_dimension_numbers<[1], [0], [0], [1], [0, 0, 1, 1], [], []>} : vector<8x8xf32>, vector<8x16xf32>, vector<8x16xf32> -> vector<8x16xf32>
    %27 = vector.extract_strided_slice %6 {offsets = [0, 16], sizes = [8, 16], strides = [1, 1]} : vector<16x32xf32> to vector<8x16xf32>
    %28 = vector.extract_strided_slice %7 {offsets = [0, 16], sizes = [8, 16], strides = [1, 1]} : vector<16x32xf32> to vector<8x16xf32>
    %29 = vector.extract_strided_slice %8 {offsets = [0, 16], sizes = [8, 16], strides = [1, 1]} : vector<16x32xf32> to vector<8x16xf32>
    %30 = tpu.transpose %28, [1, 0] : vector<8x16xf32> -> vector<16x8xf32>
    %cst_10 = arith.constant dense<0.000000e+00> : vector<8x8xf32>
    %31 = tpu.matmul %27, %30, %cst_10 {dimension_numbers = #tpu.dot_dimension_numbers<[1], [0], [0], [1], [0, 0, 1, 1], [], []>} : vector<8x16xf32>, vector<16x8xf32>, vector<8x8xf32> -> vector<8x8xf32>
    %cst_11 = arith.constant 2.500000e-01 : f32
    %32 = vector.broadcast %cst_11 : f32 to vector<8x8xf32>
    %33 = arith.mulf %31, %32 : vector<8x8xf32>
    %cst_12 = arith.constant dense<0xFF800000> : vector<8xf32>
    %34 = vector.multi_reduction <maximumf>, %33, %cst_12 [1] : vector<8x8xf32> to vector<8xf32>
    %35 = vector.shape_cast %34 : vector<8xf32> to vector<8x1xf32>
    %36 = vector.broadcast %35 : vector<8x1xf32> to vector<8x8xf32>
    %37 = arith.subf %33, %36 : vector<8x8xf32>
    %38 = math.exp %37 : vector<8x8xf32>
    %cst_13 = arith.constant dense<0.000000e+00> : vector<8xf32>
    %39 = vector.multi_reduction <add>, %38, %cst_13 [1] : vector<8x8xf32> to vector<8xf32>
    %40 = vector.shape_cast %39 : vector<8xf32> to vector<8x1xf32>
    %41 = tpu.reciprocal %40 {approx = true} : vector<8x1xf32> -> vector<8x1xf32>
    %42 = vector.broadcast %41 : vector<8x1xf32> to vector<8x8xf32>
    %43 = arith.mulf %38, %42 : vector<8x8xf32>
    %cst_14 = arith.constant dense<0.000000e+00> : vector<8x16xf32>
    %44 = tpu.matmul %43, %29, %cst_14 {dimension_numbers = #tpu.dot_dimension_numbers<[1], [0], [0], [1], [0, 0, 1, 1], [], []>} : vector<8x8xf32>, vector<8x16xf32>, vector<8x16xf32> -> vector<8x16xf32>
    %45 = tpu.concatenate %26, %44 in 1 : vector<8x16xf32>, vector<8x16xf32> -> vector<8x32xf32>
    %46 = vector.extract_strided_slice %6 {offsets = [8, 0], sizes = [8, 16], strides = [1, 1]} : vector<16x32xf32> to vector<8x16xf32>
    %47 = vector.extract_strided_slice %7 {offsets = [8, 0], sizes = [8, 16], strides = [1, 1]} : vector<16x32xf32> to vector<8x16xf32>
    %48 = vector.extract_strided_slice %8 {offsets = [8, 0], sizes = [8, 16], strides = [1, 1]} : vector<16x32xf32> to vector<8x16xf32>
    %49 = tpu.transpose %47, [1, 0] : vector<8x16xf32> -> vector<16x8xf32>
    %cst_15 = arith.constant dense<0.000000e+00> : vector<8x8xf32>
    %50 = tpu.matmul %46, %49, %cst_15 {dimension_numbers = #tpu.dot_dimension_numbers<[1], [0], [0], [1], [0, 0, 1, 1], [], []>} : vector<8x16xf32>, vector<16x8xf32>, vector<8x8xf32> -> vector<8x8xf32>
    %cst_16 = arith.constant 2.500000e-01 : f32
    %51 = vector.broadcast %cst_16 : f32 to vector<8x8xf32>
    %52 = arith.mulf %50, %51 : vector<8x8xf32>
    %cst_17 = arith.constant dense<0xFF800000> : vector<8xf32>
    %53 = vector.multi_reduction <maximumf>, %52, %cst_17 [1] : vector<8x8xf32> to vector<8xf32>
    %54 = vector.shape_cast %53 : vector<8xf32> to vector<8x1xf32>
    %55 = vector.broadcast %54 : vector<8x1xf32> to vector<8x8xf32>
    %56 = arith.subf %52, %55 : vector<8x8xf32>
    %57 = math.exp %56 : vector<8x8xf32>
    %cst_18 = arith.constant dense<0.000000e+00> : vector<8xf32>
    %58 = vector.multi_reduction <add>, %57, %cst_18 [1] : vector<8x8xf32> to vector<8xf32>
    %59 = vector.shape_cast %58 : vector<8xf32> to vector<8x1xf32>
    %60 = tpu.reciprocal %59 {approx = true} : vector<8x1xf32> -> vector<8x1xf32>
    %61 = vector.broadcast %60 : vector<8x1xf32> to vector<8x8xf32>
    %62 = arith.mulf %57, %61 : vector<8x8xf32>
    %cst_19 = arith.constant dense<0.000000e+00> : vector<8x16xf32>
    %63 = tpu.matmul %62, %48, %cst_19 {dimension_numbers = #tpu.dot_dimension_numbers<[1], [0], [0], [1], [0, 0, 1, 1], [], []>} : vector<8x8xf32>, vector<8x16xf32>, vector<8x16xf32> -> vector<8x16xf32>
    %64 = vector.extract_strided_slice %6 {offsets = [8, 16], sizes = [8, 16], strides = [1, 1]} : vector<16x32xf32> to vector<8x16xf32>
    %65 = vector.extract_strided_slice %7 {offsets = [8, 16], sizes = [8, 16], strides = [1, 1]} : vector<16x32xf32> to vector<8x16xf32>
    %66 = vector.extract_strided_slice %8 {offsets = [8, 16], sizes = [8, 16], strides = [1, 1]} : vector<16x32xf32> to vector<8x16xf32>
    %67 = tpu.transpose %65, [1, 0] : vector<8x16xf32> -> vector<16x8xf32>
    %cst_20 = arith.constant dense<0.000000e+00> : vector<8x8xf32>
    %68 = tpu.matmul %64, %67, %cst_20 {dimension_numbers = #tpu.dot_dimension_numbers<[1], [0], [0], [1], [0, 0, 1, 1], [], []>} : vector<8x16xf32>, vector<16x8xf32>, vector<8x8xf32> -> vector<8x8xf32>
    %cst_21 = arith.constant 2.500000e-01 : f32
    %69 = vector.broadcast %cst_21 : f32 to vector<8x8xf32>
    %70 = arith.mulf %68, %69 : vector<8x8xf32>
    %cst_22 = arith.constant dense<0xFF800000> : vector<8xf32>
    %71 = vector.multi_reduction <maximumf>, %70, %cst_22 [1] : vector<8x8xf32> to vector<8xf32>
    %72 = vector.shape_cast %71 : vector<8xf32> to vector<8x1xf32>
    %73 = vector.broadcast %72 : vector<8x1xf32> to vector<8x8xf32>
    %74 = arith.subf %70, %73 : vector<8x8xf32>
    %75 = math.exp %74 : vector<8x8xf32>
    %cst_23 = arith.constant dense<0.000000e+00> : vector<8xf32>
    %76 = vector.multi_reduction <add>, %75, %cst_23 [1] : vector<8x8xf32> to vector<8xf32>
    %77 = vector.shape_cast %76 : vector<8xf32> to vector<8x1xf32>
    %78 = tpu.reciprocal %77 {approx = true} : vector<8x1xf32> -> vector<8x1xf32>
    %79 = vector.broadcast %78 : vector<8x1xf32> to vector<8x8xf32>
    %80 = arith.mulf %75, %79 : vector<8x8xf32>
    %cst_24 = arith.constant dense<0.000000e+00> : vector<8x16xf32>
    %81 = tpu.matmul %80, %66, %cst_24 {dimension_numbers = #tpu.dot_dimension_numbers<[1], [0], [0], [1], [0, 0, 1, 1], [], []>} : vector<8x8xf32>, vector<8x16xf32>, vector<8x16xf32> -> vector<8x16xf32>
    %82 = tpu.concatenate %63, %81 in 1 : vector<8x16xf32>, vector<8x16xf32> -> vector<8x32xf32>
    %83 = tpu.concatenate %45, %82 in 0 : vector<8x32xf32>, vector<8x32xf32> -> vector<16x32xf32>
    %c0_25 = arith.constant 0 : index
    %c0_26 = arith.constant 0 : index
    %84 = vector.load %arg3[%c0_25, %c0_26] : memref<32x32xf32, #tpu.memory_space<vmem>>, vector<32x32xf32>
    %cst_27 = arith.constant dense<0.000000e+00> : vector<16x32xf32>
    %85 = tpu.matmul %83, %84, %cst_27 {dimension_numbers = #tpu.dot_dimension_numbers<[1], [0], [0], [1], [0, 0, 1, 1], [], []>} : vector<16x32xf32>, vector<32x32xf32>, vector<16x32xf32> -> vector<16x32xf32>
    %c0_28 = arith.constant 0 : index
    %c0_29 = arith.constant 0 : index
    %86 = vector.load %arg4[%c0_28, %c0_29] : memref<1x32xf32, #tpu.memory_space<vmem>>, vector<1x32xf32>
    %87 = vector.broadcast %86 : vector<1x32xf32> to vector<16x32xf32>
    %88 = arith.addf %85, %87 : vector<16x32xf32>
    %89 = arith.addf %0, %88 : vector<16x32xf32>
    %c0_30 = arith.constant 0 : index
    %c0_31 = arith.constant 0 : index
    %90 = vector.load %arg9[%c0_30, %c0_31] : memref<1x32xf32, #tpu.memory_space<vmem>>, vector<1x32xf32>
    %c0_32 = arith.constant 0 : index
    %c0_33 = arith.constant 0 : index
    %91 = vector.load %arg10[%c0_32, %c0_33] : memref<1x32xf32, #tpu.memory_space<vmem>>, vector<1x32xf32>
    %cst_34 = arith.constant dense<0.000000e+00> : vector<16xf32>
    %92 = vector.multi_reduction <add>, %89, %cst_34 [1] : vector<16x32xf32> to vector<16xf32>
    %93 = vector.shape_cast %92 : vector<16xf32> to vector<16x1xf32>
    %cst_35 = arith.constant 3.200000e+01 : f32
    %94 = vector.broadcast %cst_35 : f32 to vector<16x1xf32>
    %95 = arith.divf %93, %94 : vector<16x1xf32>
    %96 = vector.broadcast %95 : vector<16x1xf32> to vector<16x32xf32>
    %97 = arith.subf %89, %96 : vector<16x32xf32>
    %98 = arith.mulf %97, %97 : vector<16x32xf32>
    %cst_36 = arith.constant dense<0.000000e+00> : vector<16xf32>
    %99 = vector.multi_reduction <add>, %98, %cst_36 [1] : vector<16x32xf32> to vector<16xf32>
    %100 = vector.shape_cast %99 : vector<16xf32> to vector<16x1xf32>
    %cst_37 = arith.constant 3.200000e+01 : f32
    %101 = vector.broadcast %cst_37 : f32 to vector<16x1xf32>
    %102 = arith.divf %100, %101 : vector<16x1xf32>
    %103 = vector.broadcast %95 : vector<16x1xf32> to vector<16x32xf32>
    %104 = arith.subf %89, %103 : vector<16x32xf32>
    %cst_38 = arith.constant 9.99999974E-6 : f32
    %105 = vector.broadcast %cst_38 : f32 to vector<16x1xf32>
    %106 = arith.addf %102, %105 : vector<16x1xf32>
    %107 = math.rsqrt %106 : vector<16x1xf32>
    %108 = vector.broadcast %107 : vector<16x1xf32> to vector<16x32xf32>
    %109 = arith.mulf %104, %108 : vector<16x32xf32>
    %110 = vector.broadcast %90 : vector<1x32xf32> to vector<16x32xf32>
    %111 = arith.mulf %109, %110 : vector<16x32xf32>
    %112 = vector.broadcast %91 : vector<1x32xf32> to vector<16x32xf32>
    %113 = arith.addf %111, %112 : vector<16x32xf32>
    %c0_39 = arith.constant 0 : index
    %c0_40 = arith.constant 0 : index
    %114 = vector.load %arg5[%c0_39, %c0_40] : memref<32x64xf32, #tpu.memory_space<vmem>>, vector<32x64xf32>
    %cst_41 = arith.constant dense<0.000000e+00> : vector<16x64xf32>
    %115 = tpu.matmul %113, %114, %cst_41 {dimension_numbers = #tpu.dot_dimension_numbers<[1], [0], [0], [1], [0, 0, 1, 1], [], []>} : vector<16x32xf32>, vector<32x64xf32>, vector<16x64xf32> -> vector<16x64xf32>
    %c0_42 = arith.constant 0 : index
    %c0_43 = arith.constant 0 : index
    %116 = vector.load %arg6[%c0_42, %c0_43] : memref<1x64xf32, #tpu.memory_space<vmem>>, vector<1x64xf32>
    %117 = vector.broadcast %116 : vector<1x64xf32> to vector<16x64xf32>
    %118 = arith.addf %115, %117 : vector<16x64xf32>
    %cst_44 = arith.constant 0.000000e+00 : f32
    %119 = vector.broadcast %cst_44 : f32 to vector<16x64xf32>
    %120 = arith.maximumf %118, %119 : vector<16x64xf32>
    %c0_45 = arith.constant 0 : index
    %c0_46 = arith.constant 0 : index
    %121 = vector.load %arg7[%c0_45, %c0_46] : memref<64x32xf32, #tpu.memory_space<vmem>>, vector<64x32xf32>
    %cst_47 = arith.constant dense<0.000000e+00> : vector<16x32xf32>
    %122 = tpu.matmul %120, %121, %cst_47 {dimension_numbers = #tpu.dot_dimension_numbers<[1], [0], [0], [1], [0, 0, 1, 1], [], []>} : vector<16x64xf32>, vector<64x32xf32>, vector<16x32xf32> -> vector<16x32xf32>
    %c0_48 = arith.constant 0 : index
    %c0_49 = arith.constant 0 : index
    %123 = vector.load %arg8[%c0_48, %c0_49] : memref<1x32xf32, #tpu.memory_space<vmem>>, vector<1x32xf32>
    %124 = vector.broadcast %123 : vector<1x32xf32> to vector<16x32xf32>
    %125 = arith.addf %122, %124 : vector<16x32xf32>
    %126 = arith.addf %113, %125 : vector<16x32xf32>
    %c0_50 = arith.constant 0 : index
    %c0_51 = arith.constant 0 : index
    %127 = vector.load %arg11[%c0_50, %c0_51] : memref<1x32xf32, #tpu.memory_space<vmem>>, vector<1x32xf32>
    %c0_52 = arith.constant 0 : index
    %c0_53 = arith.constant 0 : index
    %128 = vector.load %arg12[%c0_52, %c0_53] : memref<1x32xf32, #tpu.memory_space<vmem>>, vector<1x32xf32>
    %cst_54 = arith.constant dense<0.000000e+00> : vector<16xf32>
    %129 = vector.multi_reduction <add>, %126, %cst_54 [1] : vector<16x32xf32> to vector<16xf32>
    %130 = vector.shape_cast %129 : vector<16xf32> to vector<16x1xf32>
    %cst_55 = arith.constant 3.200000e+01 : f32
    %131 = vector.broadcast %cst_55 : f32 to vector<16x1xf32>
    %132 = arith.divf %130, %131 : vector<16x1xf32>
    %133 = vector.broadcast %132 : vector<16x1xf32> to vector<16x32xf32>
    %134 = arith.subf %126, %133 : vector<16x32xf32>
    %135 = arith.mulf %134, %134 : vector<16x32xf32>
    %cst_56 = arith.constant dense<0.000000e+00> : vector<16xf32>
    %136 = vector.multi_reduction <add>, %135, %cst_56 [1] : vector<16x32xf32> to vector<16xf32>
    %137 = vector.shape_cast %136 : vector<16xf32> to vector<16x1xf32>
    %cst_57 = arith.constant 3.200000e+01 : f32
    %138 = vector.broadcast %cst_57 : f32 to vector<16x1xf32>
    %139 = arith.divf %137, %138 : vector<16x1xf32>
    %140 = vector.broadcast %132 : vector<16x1xf32> to vector<16x32xf32>
    %141 = arith.subf %126, %140 : vector<16x32xf32>
    %cst_58 = arith.constant 9.99999974E-6 : f32
    %142 = vector.broadcast %cst_58 : f32 to vector<16x1xf32>
    %143 = arith.addf %139, %142 : vector<16x1xf32>
    %144 = math.rsqrt %143 : vector<16x1xf32>
    %145 = vector.broadcast %144 : vector<16x1xf32> to vector<16x32xf32>
    %146 = arith.mulf %141, %145 : vector<16x32xf32>
    %147 = vector.broadcast %127 : vector<1x32xf32> to vector<16x32xf32>
    %148 = arith.mulf %146, %147 : vector<16x32xf32>
    %149 = vector.broadcast %128 : vector<1x32xf32> to vector<16x32xf32>
    %150 = arith.addf %148, %149 : vector<16x32xf32>
    %c0_59 = arith.constant 0 : index
    %c0_60 = arith.constant 0 : index
    %151 = vector.load %arg13[%c0_59, %c0_60] : memref<16x32xf32, #tpu.memory_space<vmem>>, vector<16x32xf32>
    tpu.vector_store %arg13[%c0_59, %c0_60], %150 {strides = array<i32>} : memref<16x32xf32, #tpu.memory_space<vmem>>, vector<16x32xf32>,
    return
  }
}

</mosaic_0001>

<llo_original>
// kernel: context_embed_forward.1
$region0: #{context_embed_forward.1}
  #allocation0 [shape = 'u32[]', space=smem, size = 0x4, offset = 0x4, fixed_abs, tag = 'smem constant byte address 0x4 - core index']
  #allocation1 [shape = 'u32[144,128]{1,0:T(1,128)}', space=vmem, size = 0x12000, scoped, tag = 'internal scratch']
  %s0 = inlined_call_operand.hbm [shape: f32[16,32], index: 0, kind: input, shape index: {}]
  %s1 = inlined_call_operand.vmem [shape: f32[32,96], index: 1, kind: input, shape index: {}]
  %s2 = inlined_call_operand.vmem [shape: f32[1,96], index: 2, kind: input, shape index: {}]
  %s3 = inlined_call_operand.vmem [shape: f32[32,32], index: 3, kind: input, shape index: {}]
  %s4 = inlined_call_operand.vmem [shape: f32[1,32], index: 4, kind: input, shape index: {}]
  %s5 = inlined_call_operand.vmem [shape: f32[32,64], index: 5, kind: input, shape index: {}]
  %s6 = inlined_call_operand.vmem [shape: f32[1,64], index: 6, kind: input, shape index: {}]
  %s7 = inlined_call_operand.vmem [shape: f32[64,32], index: 7, kind: input, shape index: {}]
  %s8 = inlined_call_operand.vmem [shape: f32[1,32], index: 8, kind: input, shape index: {}]
  %s9 = inlined_call_operand.vmem [shape: f32[1,32], index: 9, kind: input, shape index: {}]
  %s10 = inlined_call_operand.vmem [shape: f32[1,32], index: 10, kind: input, shape index: {}]
  %s11 = inlined_call_operand.vmem [shape: f32[1,32], index: 11, kind: input, shape index: {}]
  %s12 = inlined_call_operand.vmem [shape: f32[1,32], index: 12, kind: input, shape index: {}]
  %s13 = inlined_call_operand.hbm [shape: f32[16,32], index: 13, kind: output, shape index: {}]
  %s14 = sld [smem:[#allocation0]]
  $region66: #{context_embed_forward.1} parent=0
    _
  %s16 = ssub.s32 1, %s14
  %s17 = scalar_select 0, %s16, %s14
  $region1: #{context_embed_forward.1} parent=0
    #allocation2 [shape = 'u8[8192]{0}', space=vmem, size = 0x2000, scoped, tag = 'input window, operand 0, single buffered']
    #allocation3 [shape = 's32[1]{0}', space=sflag, size = 0x4, scoped, tag = 'scoped memory for context_embed_forward.1']
    #allocation4 [shape = 's32[1]{0}', space=sflag, size = 0x4, scoped, tag = 'scoped memory for context_embed_forward.1']
    #allocation5 [shape = 'u8[8192]{0}', space=vmem, size = 0x2000, scoped, tag = 'output window, operand 0, single buffered']
    %18 = vsyncpa [#allocation3], 0
    %19 = vsyncpa [#allocation4], 0
    // Predicated region
    $region2: #{context_embed_forward.1} parent=1 // pred_check
      _
    $region3: #{context_embed_forward.1} parent=1 // pred_check_branch
      %21 = sbr.rel (0) target = $region5
    $region4: #{context_embed_forward.1} parent=1 // pred_region
      %s23 = ssub.s32 256, 256
      %24 = vsyncadd [#allocation3], %s23
      %s25 = sshll.u32 [#allocation2], 4
      %s26 = int_to_ptr.vmem [resolvable:$true] %s25
      %31 = dma.hbm_to_vmem [thread:$0]  %s0, 256, %s26, [#allocation3], 128, 128, 8
    $region5: #{context_embed_forward.1} parent=1 // pred_fallthru
      _
    // Predicated region
    $region6: #{context_embed_forward.1} parent=1 // pred_check
      _
    $region7: #{context_embed_forward.1} parent=1 // pred_check_branch
      %33 = sbr.rel (0) target = $region9
    $region8: #{context_embed_forward.1} parent=1 // pred_region
      _
    $region9: #{context_embed_forward.1} parent=1 // pred_fallthru
      _
    // Predicated region
    $region10: #{context_embed_forward.1} parent=1 // pred_check
      _
    $region11: #{context_embed_forward.1} parent=1 // pred_check_branch
      %35 = sbr.rel (0) target = $region13
    $region12: #{context_embed_forward.1} parent=1 // pred_region
      _
    $region13: #{context_embed_forward.1} parent=1 // pred_fallthru
      _
    // Predicated region
    $region14: #{context_embed_forward.1} parent=1 // pred_check
      _
    $region15: #{context_embed_forward.1} parent=1 // pred_check_branch
      %37 = sbr.rel (0) target = $region17
    $region16: #{context_embed_forward.1} parent=1 // pred_region
      _
    $region17: #{context_embed_forward.1} parent=1 // pred_fallthru
      _
    // Predicated region
    $region18: #{context_embed_forward.1} parent=1 // pred_check
      _
    $region19: #{context_embed_forward.1} parent=1 // pred_check_branch
      %39 = sbr.rel (0) target = $region21
    $region20: #{context_embed_forward.1} parent=1 // pred_region
      _
    $region21: #{context_embed_forward.1} parent=1 // pred_fallthru
      _
    // Predicated region
    $region22: #{context_embed_forward.1} parent=1 // pred_check
      _
    $region23: #{context_embed_forward.1} parent=1 // pred_check_branch
      %41 = sbr.rel (0) target = $region25
    $region24: #{context_embed_forward.1} parent=1 // pred_region
      _
    $region25: #{context_embed_forward.1} parent=1 // pred_fallthru
      _
    // Predicated region
    $region26: #{context_embed_forward.1} parent=1 // pred_check
      _
    $region27: #{context_embed_forward.1} parent=1 // pred_check_branch
      %43 = sbr.rel (0) target = $region29
    $region28: #{context_embed_forward.1} parent=1 // pred_region
      _
    $region29: #{context_embed_forward.1} parent=1 // pred_fallthru
      _
    // Predicated region
    $region30: #{context_embed_forward.1} parent=1 // pred_check
      _
    $region31: #{context_embed_forward.1} parent=1 // pred_check_branch
      %45 = sbr.rel (0) target = $region33
    $region32: #{context_embed_forward.1} parent=1 // pred_region
      _
    $region33: #{context_embed_forward.1} parent=1 // pred_fallthru
      _
    // Predicated region
    $region34: #{context_embed_forward.1} parent=1 // pred_check
      _
    $region35: #{context_embed_forward.1} parent=1 // pred_check_branch
      %47 = sbr.rel (0) target = $region37
    $region36: #{context_embed_forward.1} parent=1 // pred_region
      _
    $region37: #{context_embed_forward.1} parent=1 // pred_fallthru
      _
    // Predicated region
    $region38: #{context_embed_forward.1} parent=1 // pred_check
      _
    $region39: #{context_embed_forward.1} parent=1 // pred_check_branch
      %49 = sbr.rel (0) target = $region41
    $region40: #{context_embed_forward.1} parent=1 // pred_region
      _
    $region41: #{context_embed_forward.1} parent=1 // pred_fallthru
      _
    // Predicated region
    $region42: #{context_embed_forward.1} parent=1 // pred_check
      _
    $region43: #{context_embed_forward.1} parent=1 // pred_check_branch
      %51 = sbr.rel (0) target = $region45
    $region44: #{context_embed_forward.1} parent=1 // pred_region
      _
    $region45: #{context_embed_forward.1} parent=1 // pred_fallthru
      _
    // Predicated region
    $region46: #{context_embed_forward.1} parent=1 // pred_check
      _
    $region47: #{context_embed_forward.1} parent=1 // pred_check_branch
      %53 = sbr.rel (0) target = $region49
    $region48: #{context_embed_forward.1} parent=1 // pred_region
      _
    $region49: #{context_embed_forward.1} parent=1 // pred_fallthru
      _
    // Predicated region
    $region50: #{context_embed_forward.1} parent=1 // pred_check
      _
    $region51: #{context_embed_forward.1} parent=1 // pred_check_branch
      %55 = sbr.rel (0) target = $region53
    $region52: #{context_embed_forward.1} parent=1 // pred_region
      _
    $region53: #{context_embed_forward.1} parent=1 // pred_fallthru
      _
    // Predicated region
    $region54: #{context_embed_forward.1} parent=1 // pred_check
      _
    $region55: #{context_embed_forward.1} parent=1 // pred_check_branch
      %57 = sbr.rel (0) target = $region57
    $region56: #{context_embed_forward.1} parent=1 // pred_region
      %58 = dma.done [#allocation3], 256
    $region57: #{context_embed_forward.1} parent=1 // pred_fallthru
      _
    %v59 = vld [vmem:[#allocation2] sm:$0xff]
    %v60 = vld [vmem:[#allocation2 + $0x8] sm:$0xff]
    %v61 = vld [vmem:[%s1] sm:$0xff]
    %v62 = vld [vmem:[%s1 + $0x8] sm:$0xff]
    %v63 = vld [vmem:[%s1 + $0x10] sm:$0xff]
    %v64 = vld [vmem:[%s1 + $0x18] sm:$0xff]
    %v65 = vld [vmem:[%s2] sm:$0x1]
    %v67 = vlaneseq
    %v68 = vshrl.u32 %v67, 7
    %v69 = vsub.s32 0, %v68
    %v70 = vrot.slane %v65, %v69
    %vm72 = vcmask 261120
    %v74 = vsel %vm72, %v59, 0
    %v77 = vsel %vm72, %v60, 0
    %79 = vmatprep.subr.mxu0 0.0
    %80 = vmatpush1.msra.mxu0 %v61
    %81 = vmatprep.subr.mxu0 0.0
    %82 = vmatpush1.msra.mxu0 %v62
    %83 = vmatprep.subr.mxu0 0.0
    %84 = vmatpush1.msra.mxu0 %v63
    %85 = vmatprep.subr.mxu0 0.0
    %86 = vmatpush1.msra.mxu0 %v64
    %87 = vmatprep.subr.mxu0 0.0
    %88 = vmatpush1.msra.mxu0 0.0
    %89 = vmatprep.subr.mxu0 0.0
    %90 = vmatpush1.msra.mxu0 0.0
    %91 = vmatprep.subr.mxu0 0.0
    %92 = vmatpush1.msra.mxu0 0.0
    %93 = vmatprep.subr.mxu0 0.0
    %94 = vmatpush1.msra.mxu0 0.0
    %95 = vmatprep.subr.mxu0 0.0
    %96 = vmatpush1.msra.mxu0 0.0
    %97 = vmatprep.subr.mxu0 0.0
    %98 = vmatpush1.msra.mxu0 0.0
    %99 = vmatprep.subr.mxu0 0.0
    %100 = vmatpush1.msra.mxu0 0.0
    %101 = vmatprep.subr.mxu0 0.0
    %102 = vmatpush1.msra.mxu0 0.0
    %103 = vmatprep.subr.mxu0 0.0
    %104 = vmatpush1.msra.mxu0 0.0
    %105 = vmatprep.subr.mxu0 0.0
    %106 = vmatpush1.msra.mxu0 0.0
    %107 = vmatprep.subr.mxu0 0.0
    %108 = vmatpush1.msra.mxu0 0.0
    %109 = vmatprep.subr.mxu0 0.0
    %110 = vmatpush1.msra.mxu0 0.0
    %111 = vmatprep.subr.mxu0 0.0
    %112 = vmatpush1.msra.mxu0 0.0
    %113 = vmatprep.subr.mxu0 0.0
    %114 = vmatpush1.msra.mxu0 0.0
    %115 = vmatprep.subr.mxu0 0.0
    %116 = vmatpush1.msra.mxu0 0.0
    %117 = vmatprep.subr.mxu0 0.0
    %118 = vmatpush1.msra.mxu0 0.0
    %119 = vmatprep.subr.mxu0 0.0
    %120 = vmatpush1.msra.mxu0 0.0
    %121 = vmatprep.subr.mxu0 0.0
    %122 = vmatpush1.msra.mxu0 0.0
    %123 = vmatprep.subr.mxu0 0.0
    %124 = vmatpush1.msra.mxu0 0.0
    %125 = vmatprep.subr.mxu0 0.0
    %126 = vmatpush1.msra.mxu0 0.0
    %127 = vmatprep.subr.mxu0 0.0
    %128 = vmatpush1.msra.mxu0 0.0
    %129 = vmatprep.subr.mxu0 0.0
    %130 = vmatpush1.msra.mxu0 0.0
    %131 = vmatprep.subr.mxu0 0.0
    %132 = vmatpush1.msra.mxu0 0.0
    %133 = vmatprep.subr.mxu0 0.0
    %134 = vmatpush1.msra.mxu0 0.0
    %135 = vmatprep.subr.mxu0 0.0
    %136 = vmatpush1.msra.mxu0 0.0
    %137 = vmatprep.subr.mxu0 0.0
    %138 = vmatpush1.msra.mxu0 0.0
    %139 = vmatprep.subr.mxu0 0.0
    %140 = vmatpush1.msra.mxu0 0.0
    %141 = vmatprep.subr.mxu0 0.0
    %142 = vmatpush1.msra.mxu0 0.0
    %143 = vmatprep.mubr.f32.mxu0 0.0
    %144 = vmatmul.mubr.f32.gmra.mrb[0].mxu0 %v74
    %v145 = vpop.f32.mrb[0].mxu0
    %v146 = vadd.f32 %v70, %v145
    %v147 = vpop.f32.mrb[0].mxu0
    %148 = vmatprep.mubr.f32.mxu0 0.0
    %149 = vmatmul.mubr.f32.gmra.mrb[0].mxu0 %v77
    %v150 = vpop.f32.mrb[0].mxu0
    %v151 = vadd.f32 %v70, %v150
    %v152 = vpop.f32.mrb[0].mxu0
    %153 = vdwg.mxu0
    %155 = vrot.lane.b32.xlu0 %v146, 96
    %v156 = vpop.permute.xlu0 %155
    %vm157 = vcmask 130048
    %v158 = vsel %vm157, %v146, 0
    %v160 = vsel %vm157, %v156, 0
    %162 = vmatprep.subr.mxu0 0.0
    %163 = vmatpush1.xpose.msra.mxu0 %v160
    %164 = vmatprep.subr.mxu0 0.0
    %165 = vmatpush1.xpose.msra.mxu0 0.0
    %166 = vmatprep.subr.mxu0 0.0
    %167 = vmatpush1.xpose.msra.mxu0 0.0
    %168 = vmatprep.subr.mxu0 0.0
    %169 = vmatpush1.xpose.msra.mxu0 0.0
    %170 = vmatprep.subr.mxu0 0.0
    %171 = vmatpush1.xpose.msra.mxu0 0.0
    %172 = vmatprep.subr.mxu0 0.0
    %173 = vmatpush1.xpose.msra.mxu0 0.0
    %174 = vmatprep.subr.mxu0 0.0
    %175 = vmatpush1.xpose.msra.mxu0 0.0
    %176 = vmatprep.subr.mxu0 0.0
    %177 = vmatpush1.xpose.msra.mxu0 0.0
    %178 = vmatprep.subr.mxu0 0.0
    %179 = vmatpush1.xpose.msra.mxu0 0.0
    %180 = vmatprep.subr.mxu0 0.0
    %181 = vmatpush1.xpose.msra.mxu0 0.0
    %182 = vmatprep.subr.mxu0 0.0
    %183 = vmatpush1.xpose.msra.mxu0 0.0
    %184 = vmatprep.subr.mxu0 0.0
    %185 = vmatpush1.xpose.msra.mxu0 0.0
    %186 = vmatprep.subr.mxu0 0.0
    %187 = vmatpush1.xpose.msra.mxu0 0.0
    %188 = vmatprep.subr.mxu0 0.0
    %189 = vmatpush1.xpose.msra.mxu0 0.0
    %190 = vmatprep.subr.mxu0 0.0
    %191 = vmatpush1.xpose.msra.mxu0 0.0
    %192 = vmatprep.subr.mxu0 0.0
    %193 = vmatpush1.xpose.msra.mxu0 0.0
    %194 = vmatprep.subr.mxu0 0.0
    %195 = vmatpush1.xpose.msra.mxu0 0.0
    %196 = vmatprep.subr.mxu0 0.0
    %197 = vmatpush1.xpose.msra.mxu0 0.0
    %198 = vmatprep.subr.mxu0 0.0
    %199 = vmatpush1.xpose.msra.mxu0 0.0
    %200 = vmatprep.subr.mxu0 0.0
    %201 = vmatpush1.xpose.msra.mxu0 0.0
    %202 = vmatprep.subr.mxu0 0.0
    %203 = vmatpush1.xpose.msra.mxu0 0.0
    %204 = vmatprep.subr.mxu0 0.0
    %205 = vmatpush1.xpose.msra.mxu0 0.0
    %206 = vmatprep.subr.mxu0 0.0
    %207 = vmatpush1.xpose.msra.mxu0 0.0
    %208 = vmatprep.subr.mxu0 0.0
    %209 = vmatpush1.xpose.msra.mxu0 0.0
    %210 = vmatprep.subr.mxu0 0.0
    %211 = vmatpush1.xpose.msra.mxu0 0.0
    %212 = vmatprep.subr.mxu0 0.0
    %213 = vmatpush1.xpose.msra.mxu0 0.0
    %214 = vmatprep.subr.mxu0 0.0
    %215 = vmatpush1.xpose.msra.mxu0 0.0
    %216 = vmatprep.subr.mxu0 0.0
    %217 = vmatpush1.xpose.msra.mxu0 0.0
    %218 = vmatprep.subr.mxu0 0.0
    %219 = vmatpush1.xpose.msra.mxu0 0.0
    %220 = vmatprep.subr.mxu0 0.0
    %221 = vmatpush1.xpose.msra.mxu0 0.0
    %222 = vmatprep.subr.mxu0 0.0
    %223 = vmatpush1.xpose.msra.mxu0 0.0
    %224 = vmatprep.subr.mxu0 0.0
    %225 = vmatpush1.xpose.msra.mxu0 0.0
    %226 = vmatprep.mubr.f32.mxu0 0.0
    %227 = vmatmul.mubr.f32.gmra.mrb[0].mxu0 %v158
    %v228 = vpop.f32.mrb[0].mxu0
    %v229 = vadd.f32 0.0, %v228
    %v230 = vpop.f32.mrb[0].mxu0
    %231 = vdwg.mxu0
    %v232 = vmul.f32 %v229, 0.25
    %vm233 = vcmask 64512
    %v234 = vsel %vm233, %v232, -inf
    %235 = vmax.xlane.f32.xlu0 %v234
    %v236 = vpop.xlane.xlu0 %235
    %v237 = vsub.f32 %v232, %v236
    %v238 = vmul.f32 %v237, 1.442695
    %v239 = vpow.pop %v238
    %v240 = vsel %vm233, %v239, 0.0
    %241 = vadd.xlane.f32.xlu0 %v240
    %v242 = vpop.xlane.xlu0 %241
    %v243 = vrcp.pop %v242
    %v244 = vmul.f32 %v239, %v243
    %245 = vrot.lane.b32.xlu0 %v146, 64
    %v246 = vpop.permute.xlu0 %245
    %v249 = vsel %vm233, %v244, 0
    %251 = vmatprep.subr.mxu0 0.0
    %252 = vmatpush1.msra.mxu0 %v246
    %253 = vmatprep.subr.mxu0 0.0
    %254 = vmatpush1.msra.mxu0 0.0
    %255 = vmatprep.subr.mxu0 0.0
    %256 = vmatpush1.msra.mxu0 0.0
    %257 = vmatprep.subr.mxu0 0.0
    %258 = vmatpush1.msra.mxu0 0.0
    %259 = vmatprep.subr.mxu0 0.0
    %260 = vmatpush1.msra.mxu0 0.0
    %261 = vmatprep.subr.mxu0 0.0
    %262 = vmatpush1.msra.mxu0 0.0
    %263 = vmatprep.subr.mxu0 0.0
    %264 = vmatpush1.msra.mxu0 0.0
    %265 = vmatprep.subr.mxu0 0.0
    %266 = vmatpush1.msra.mxu0 0.0
    %267 = vmatprep.subr.mxu0 0.0
    %268 = vmatpush1.msra.mxu0 0.0
    %269 = vmatprep.subr.mxu0 0.0
    %270 = vmatpush1.msra.mxu0 0.0
    %271 = vmatprep.subr.mxu0 0.0
    %272 = vmatpush1.msra.mxu0 0.0
    %273 = vmatprep.subr.mxu0 0.0
    %274 = vmatpush1.msra.mxu0 0.0
    %275 = vmatprep.subr.mxu0 0.0
    %276 = vmatpush1.msra.mxu0 0.0
    %277 = vmatprep.subr.mxu0 0.0
    %278 = vmatpush1.msra.mxu0 0.0
    %279 = vmatprep.subr.mxu0 0.0
    %280 = vmatpush1.msra.mxu0 0.0
    %281 = vmatprep.subr.mxu0 0.0
    %282 = vmatpush1.msra.mxu0 0.0
    %283 = vmatprep.subr.mxu0 0.0
    %284 = vmatpush1.msra.mxu0 0.0
    %285 = vmatprep.subr.mxu0 0.0
    %286 = vmatpush1.msra.mxu0 0.0
    %287 = vmatprep.subr.mxu0 0.0
    %288 = vmatpush1.msra.mxu0 0.0
    %289 = vmatprep.subr.mxu0 0.0
    %290 = vmatpush1.msra.mxu0 0.0
    %291 = vmatprep.subr.mxu0 0.0
    %292 = vmatpush1.msra.mxu0 0.0
    %293 = vmatprep.subr.mxu0 0.0
    %294 = vmatpush1.msra.mxu0 0.0
    %295 = vmatprep.subr.mxu0 0.0
    %296 = vmatpush1.msra.mxu0 0.0
    %297 = vmatprep.subr.mxu0 0.0
    %298 = vmatpush1.msra.mxu0 0.0
    %299 = vmatprep.subr.mxu0 0.0
    %300 = vmatpush1.msra.mxu0 0.0
    %301 = vmatprep.subr.mxu0 0.0
    %302 = vmatpush1.msra.mxu0 0.0
    %303 = vmatprep.subr.mxu0 0.0
    %304 = vmatpush1.msra.mxu0 0.0
    %305 = vmatprep.subr.mxu0 0.0
    %306 = vmatpush1.msra.mxu0 0.0
    %307 = vmatprep.subr.mxu0 0.0
    %308 = vmatpush1.msra.mxu0 0.0
    %309 = vmatprep.subr.mxu0 0.0
    %310 = vmatpush1.msra.mxu0 0.0
    %311 = vmatprep.subr.mxu0 0.0
    %312 = vmatpush1.msra.mxu0 0.0
    %313 = vmatprep.subr.mxu0 0.0
    %314 = vmatpush1.msra.mxu0 0.0
    %315 = vmatprep.mubr.f32.mxu0 0.0
    %316 = vmatmul.mubr.f32.gmra.mrb[0].mxu0 %v249
    %v317 = vpop.f32.mrb[0].mxu0
    %v318 = vadd.f32 0.0, %v317
    %v319 = vpop.f32.mrb[0].mxu0
    %320 = vdwg.mxu0
    %321 = vrot.lane.b32.xlu0 %v146, 112
    %v322 = vpop.permute.xlu0 %321
    %323 = vrot.lane.b32.xlu0 %v146, 80
    %v324 = vpop.permute.xlu0 %323
    %v325 = vsel %vm157, %v322, 0
    %v327 = vsel %vm157, %v324, 0
    %329 = vmatprep.subr.mxu0 0.0
    %330 = vmatpush1.xpose.msra.mxu0 %v327
    %331 = vmatprep.subr.mxu0 0.0
    %332 = vmatpush1.xpose.msra.mxu0 0.0
    %333 = vmatprep.subr.mxu0 0.0
    %334 = vmatpush1.xpose.msra.mxu0 0.0
    %335 = vmatprep.subr.mxu0 0.0
    %336 = vmatpush1.xpose.msra.mxu0 0.0
    %337 = vmatprep.subr.mxu0 0.0
    %338 = vmatpush1.xpose.msra.mxu0 0.0
    %339 = vmatprep.subr.mxu0 0.0
    %340 = vmatpush1.xpose.msra.mxu0 0.0
    %341 = vmatprep.subr.mxu0 0.0
    %342 = vmatpush1.xpose.msra.mxu0 0.0
    %343 = vmatprep.subr.mxu0 0.0
    %344 = vmatpush1.xpose.msra.mxu0 0.0
    %345 = vmatprep.subr.mxu0 0.0
    %346 = vmatpush1.xpose.msra.mxu0 0.0
    %347 = vmatprep.subr.mxu0 0.0
    %348 = vmatpush1.xpose.msra.mxu0 0.0
    %349 = vmatprep.subr.mxu0 0.0
    %350 = vmatpush1.xpose.msra.mxu0 0.0
    %351 = vmatprep.subr.mxu0 0.0
    %352 = vmatpush1.xpose.msra.mxu0 0.0
    %353 = vmatprep.subr.mxu0 0.0
    %354 = vmatpush1.xpose.msra.mxu0 0.0
    %355 = vmatprep.subr.mxu0 0.0
    %356 = vmatpush1.xpose.msra.mxu0 0.0
    %357 = vmatprep.subr.mxu0 0.0
    %358 = vmatpush1.xpose.msra.mxu0 0.0
    %359 = vmatprep.subr.mxu0 0.0
    %360 = vmatpush1.xpose.msra.mxu0 0.0
    %361 = vmatprep.subr.mxu0 0.0
    %362 = vmatpush1.xpose.msra.mxu0 0.0
    %363 = vmatprep.subr.mxu0 0.0
    %364 = vmatpush1.xpose.msra.mxu0 0.0
    %365 = vmatprep.subr.mxu0 0.0
    %366 = vmatpush1.xpose.msra.mxu0 0.0
    %367 = vmatprep.subr.mxu0 0.0
    %368 = vmatpush1.xpose.msra.mxu0 0.0
    %369 = vmatprep.subr.mxu0 0.0
    %370 = vmatpush1.xpose.msra.mxu0 0.0
    %371 = vmatprep.subr.mxu0 0.0
    %372 = vmatpush1.xpose.msra.mxu0 0.0
    %373 = vmatprep.subr.mxu0 0.0
    %374 = vmatpush1.xpose.msra.mxu0 0.0
    %375 = vmatprep.subr.mxu0 0.0
    %376 = vmatpush1.xpose.msra.mxu0 0.0
    %377 = vmatprep.subr.mxu0 0.0
    %378 = vmatpush1.xpose.msra.mxu0 0.0
    %379 = vmatprep.subr.mxu0 0.0
    %380 = vmatpush1.xpose.msra.mxu0 0.0
    %381 = vmatprep.subr.mxu0 0.0
    %382 = vmatpush1.xpose.msra.mxu0 0.0
    %383 = vmatprep.subr.mxu0 0.0
    %384 = vmatpush1.xpose.msra.mxu0 0.0
    %385 = vmatprep.subr.mxu0 0.0
    %386 = vmatpush1.xpose.msra.mxu0 0.0
    %387 = vmatprep.subr.mxu0 0.0
    %388 = vmatpush1.xpose.msra.mxu0 0.0
    %389 = vmatprep.subr.mxu0 0.0
    %390 = vmatpush1.xpose.msra.mxu0 0.0
    %391 = vmatprep.subr.mxu0 0.0
    %392 = vmatpush1.xpose.msra.mxu0 0.0
    %393 = vmatprep.mubr.f32.mxu0 0.0
    %394 = vmatmul.mubr.f32.gmra.mrb[0].mxu0 %v325
    %v395 = vpop.f32.mrb[0].mxu0
    %v396 = vadd.f32 0.0, %v395
    %v397 = vpop.f32.mrb[0].mxu0
    %398 = vdwg.mxu0
    %v399 = vmul.f32 %v396, 0.25
    %v400 = vsel %vm233, %v399, -inf
    %401 = vmax.xlane.f32.xlu0 %v400
    %v402 = vpop.xlane.xlu0 %401
    %v403 = vsub.f32 %v399, %v402
    %v404 = vmul.f32 %v403, 1.442695
    %v405 = vpow.pop %v404
    %v406 = vsel %vm233, %v405, 0.0
    %407 = vadd.xlane.f32.xlu0 %v406
    %v408 = vpop.xlane.xlu0 %407
    %v409 = vrcp.pop %v408
    %v410 = vmul.f32 %v405, %v409
    %411 = vrot.lane.b32.xlu0 %v146, 48
    %v412 = vpop.permute.xlu0 %411
    %v415 = vsel %vm233, %v410, 0
    %417 = vmatprep.subr.mxu0 0.0
    %418 = vmatpush1.msra.mxu0 %v412
    %419 = vmatprep.subr.mxu0 0.0
    %420 = vmatpush1.msra.mxu0 0.0
    %421 = vmatprep.subr.mxu0 0.0
    %422 = vmatpush1.msra.mxu0 0.0
    %423 = vmatprep.subr.mxu0 0.0
    %424 = vmatpush1.msra.mxu0 0.0
    %425 = vmatprep.subr.mxu0 0.0
    %426 = vmatpush1.msra.mxu0 0.0
    %427 = vmatprep.subr.mxu0 0.0
    %428 = vmatpush1.msra.mxu0 0.0
    %429 = vmatprep.subr.mxu0 0.0
    %430 = vmatpush1.msra.mxu0 0.0
    %431 = vmatprep.subr.mxu0 0.0
    %432 = vmatpush1.msra.mxu0 0.0
    %433 = vmatprep.subr.mxu0 0.0
    %434 = vmatpush1.msra.mxu0 0.0
    %435 = vmatprep.subr.mxu0 0.0
    %436 = vmatpush1.msra.mxu0 0.0
    %437 = vmatprep.subr.mxu0 0.0
    %438 = vmatpush1.msra.mxu0 0.0
    %439 = vmatprep.subr.mxu0 0.0
    %440 = vmatpush1.msra.mxu0 0.0
    %441 = vmatprep.subr.mxu0 0.0
    %442 = vmatpush1.msra.mxu0 0.0
    %443 = vmatprep.subr.mxu0 0.0
    %444 = vmatpush1.msra.mxu0 0.0
    %445 = vmatprep.subr.mxu0 0.0
    %446 = vmatpush1.msra.mxu0 0.0
    %447 = vmatprep.subr.mxu0 0.0
    %448 = vmatpush1.msra.mxu0 0.0
    %449 = vmatprep.subr.mxu0 0.0
    %450 = vmatpush1.msra.mxu0 0.0
    %451 = vmatprep.subr.mxu0 0.0
    %452 = vmatpush1.msra.mxu0 0.0
    %453 = vmatprep.subr.mxu0 0.0
    %454 = vmatpush1.msra.mxu0 0.0
    %455 = vmatprep.subr.mxu0 0.0
    %456 = vmatpush1.msra.mxu0 0.0
    %457 = vmatprep.subr.mxu0 0.0
    %458 = vmatpush1.msra.mxu0 0.0
    %459 = vmatprep.subr.mxu0 0.0
    %460 = vmatpush1.msra.mxu0 0.0
    %461 = vmatprep.subr.mxu0 0.0
    %462 = vmatpush1.msra.mxu0 0.0
    %463 = vmatprep.subr.mxu0 0.0
    %464 = vmatpush1.msra.mxu0 0.0
    %465 = vmatprep.subr.mxu0 0.0
    %466 = vmatpush1.msra.mxu0 0.0
    %467 = vmatprep.subr.mxu0 0.0
    %468 = vmatpush1.msra.mxu0 0.0
    %469 = vmatprep.subr.mxu0 0.0
    %470 = vmatpush1.msra.mxu0 0.0
    %471 = vmatprep.subr.mxu0 0.0
    %472 = vmatpush1.msra.mxu0 0.0
    %473 = vmatprep.subr.mxu0 0.0
    %474 = vmatpush1.msra.mxu0 0.0
    %475 = vmatprep.subr.mxu0 0.0
    %476 = vmatpush1.msra.mxu0 0.0
    %477 = vmatprep.subr.mxu0 0.0
    %478 = vmatpush1.msra.mxu0 0.0
    %479 = vmatprep.subr.mxu0 0.0
    %480 = vmatpush1.msra.mxu0 0.0
    %481 = vmatprep.mubr.f32.mxu0 0.0
    %482 = vmatmul.mubr.f32.gmra.mrb[0].mxu0 %v415
    %v483 = vpop.f32.mrb[0].mxu0
    %v484 = vadd.f32 0.0, %v483
    %v485 = vpop.f32.mrb[0].mxu0
    %486 = vdwg.mxu0
    %488 = vrot.lane.b32.xlu0 %v484, 16
    %v489 = vpop.permute.xlu0 %488
    %v491 = vsel %vm157, %v318, %v489
    %493 = vrot.lane.b32.xlu0 %v151, 96
    %v494 = vpop.permute.xlu0 %493
    %v495 = vsel %vm157, %v151, 0
    %v497 = vsel %vm157, %v494, 0
    %499 = vmatprep.subr.mxu0 0.0
    %500 = vmatpush1.xpose.msra.mxu0 %v497
    %501 = vmatprep.subr.mxu0 0.0
    %502 = vmatpush1.xpose.msra.mxu0 0.0
    %503 = vmatprep.subr.mxu0 0.0
    %504 = vmatpush1.xpose.msra.mxu0 0.0
    %505 = vmatprep.subr.mxu0 0.0
    %506 = vmatpush1.xpose.msra.mxu0 0.0
    %507 = vmatprep.subr.mxu0 0.0
    %508 = vmatpush1.xpose.msra.mxu0 0.0
    %509 = vmatprep.subr.mxu0 0.0
    %510 = vmatpush1.xpose.msra.mxu0 0.0
    %511 = vmatprep.subr.mxu0 0.0
    %512 = vmatpush1.xpose.msra.mxu0 0.0
    %513 = vmatprep.subr.mxu0 0.0
    %514 = vmatpush1.xpose.msra.mxu0 0.0
    %515 = vmatprep.subr.mxu0 0.0
    %516 = vmatpush1.xpose.msra.mxu0 0.0
    %517 = vmatprep.subr.mxu0 0.0
    %518 = vmatpush1.xpose.msra.mxu0 0.0
    %519 = vmatprep.subr.mxu0 0.0
    %520 = vmatpush1.xpose.msra.mxu0 0.0
    %521 = vmatprep.subr.mxu0 0.0
    %522 = vmatpush1.xpose.msra.mxu0 0.0
    %523 = vmatprep.subr.mxu0 0.0
    %524 = vmatpush1.xpose.msra.mxu0 0.0
    %525 = vmatprep.subr.mxu0 0.0
    %526 = vmatpush1.xpose.msra.mxu0 0.0
    %527 = vmatprep.subr.mxu0 0.0
    %528 = vmatpush1.xpose.msra.mxu0 0.0
    %529 = vmatprep.subr.mxu0 0.0
    %530 = vmatpush1.xpose.msra.mxu0 0.0
    %531 = vmatprep.subr.mxu0 0.0
    %532 = vmatpush1.xpose.msra.mxu0 0.0
    %533 = vmatprep.subr.mxu0 0.0
    %534 = vmatpush1.xpose.msra.mxu0 0.0
    %535 = vmatprep.subr.mxu0 0.0
    %536 = vmatpush1.xpose.msra.mxu0 0.0
    %537 = vmatprep.subr.mxu0 0.0
    %538 = vmatpush1.xpose.msra.mxu0 0.0
    %539 = vmatprep.subr.mxu0 0.0
    %540 = vmatpush1.xpose.msra.mxu0 0.0
    %541 = vmatprep.subr.mxu0 0.0
    %542 = vmatpush1.xpose.msra.mxu0 0.0
    %543 = vmatprep.subr.mxu0 0.0
    %544 = vmatpush1.xpose.msra.mxu0 0.0
    %545 = vmatprep.subr.mxu0 0.0
    %546 = vmatpush1.xpose.msra.mxu0 0.0
    %547 = vmatprep.subr.mxu0 0.0
    %548 = vmatpush1.xpose.msra.mxu0 0.0
    %549 = vmatprep.subr.mxu0 0.0
    %550 = vmatpush1.xpose.msra.mxu0 0.0
    %551 = vmatprep.subr.mxu0 0.0
    %552 = vmatpush1.xpose.msra.mxu0 0.0
    %553 = vmatprep.subr.mxu0 0.0
    %554 = vmatpush1.xpose.msra.mxu0 0.0
    %555 = vmatprep.subr.mxu0 0.0
    %556 = vmatpush1.xpose.msra.mxu0 0.0
    %557 = vmatprep.subr.mxu0 0.0
    %558 = vmatpush1.xpose.msra.mxu0 0.0
    %559 = vmatprep.subr.mxu0 0.0
    %560 = vmatpush1.xpose.msra.mxu0 0.0
    %561 = vmatprep.subr.mxu0 0.0
    %562 = vmatpush1.xpose.msra.mxu0 0.0
    %563 = vmatprep.mubr.f32.mxu0 0.0
    %564 = vmatmul.mubr.f32.gmra.mrb[0].mxu0 %v495
    %v565 = vpop.f32.mrb[0].mxu0
    %v566 = vadd.f32 0.0, %v565
    %v567 = vpop.f32.mrb[0].mxu0
    %568 = vdwg.mxu0
    %v569 = vmul.f32 %v566, 0.25
    %v570 = vsel %vm233, %v569, -inf
    %571 = vmax.xlane.f32.xlu0 %v570
    %v572 = vpop.xlane.xlu0 %571
    %v573 = vsub.f32 %v569, %v572
    %v574 = vmul.f32 %v573, 1.442695
    %v575 = vpow.pop %v574
    %v576 = vsel %vm233, %v575, 0.0
    %577 = vadd.xlane.f32.xlu0 %v576
    %v578 = vpop.xlane.xlu0 %577
    %v579 = vrcp.pop %v578
    %v580 = vmul.f32 %v575, %v579
    %581 = vrot.lane.b32.xlu0 %v151, 64
    %v582 = vpop.permute.xlu0 %581
    %v585 = vsel %vm233, %v580, 0
    %587 = vmatprep.subr.mxu0 0.0
    %588 = vmatpush1.msra.mxu0 %v582
    %589 = vmatprep.subr.mxu0 0.0
    %590 = vmatpush1.msra.mxu0 0.0
    %591 = vmatprep.subr.mxu0 0.0
    %592 = vmatpush1.msra.mxu0 0.0
    %593 = vmatprep.subr.mxu0 0.0
    %594 = vmatpush1.msra.mxu0 0.0
    %595 = vmatprep.subr.mxu0 0.0
    %596 = vmatpush1.msra.mxu0 0.0
    %597 = vmatprep.subr.mxu0 0.0
    %598 = vmatpush1.msra.mxu0 0.0
    %599 = vmatprep.subr.mxu0 0.0
    %600 = vmatpush1.msra.mxu0 0.0
    %601 = vmatprep.subr.mxu0 0.0
    %602 = vmatpush1.msra.mxu0 0.0
    %603 = vmatprep.subr.mxu0 0.0
    %604 = vmatpush1.msra.mxu0 0.0
    %605 = vmatprep.subr.mxu0 0.0
    %606 = vmatpush1.msra.mxu0 0.0
    %607 = vmatprep.subr.mxu0 0.0
    %608 = vmatpush1.msra.mxu0 0.0
    %609 = vmatprep.subr.mxu0 0.0
    %610 = vmatpush1.msra.mxu0 0.0
    %611 = vmatprep.subr.mxu0 0.0
    %612 = vmatpush1.msra.mxu0 0.0
    %613 = vmatprep.subr.mxu0 0.0
    %614 = vmatpush1.msra.mxu0 0.0
    %615 = vmatprep.subr.mxu0 0.0
    %616 = vmatpush1.msra.mxu0 0.0
    %617 = vmatprep.subr.mxu0 0.0
    %618 = vmatpush1.msra.mxu0 0.0
    %619 = vmatprep.subr.mxu0 0.0
    %620 = vmatpush1.msra.mxu0 0.0
    %621 = vmatprep.subr.mxu0 0.0
    %622 = vmatpush1.msra.mxu0 0.0
    %623 = vmatprep.subr.mxu0 0.0
    %624 = vmatpush1.msra.mxu0 0.0
    %625 = vmatprep.subr.mxu0 0.0
    %626 = vmatpush1.msra.mxu0 0.0
    %627 = vmatprep.subr.mxu0 0.0
    %628 = vmatpush1.msra.mxu0 0.0
    %629 = vmatprep.subr.mxu0 0.0
    %630 = vmatpush1.msra.mxu0 0.0
    %631 = vmatprep.subr.mxu0 0.0
    %632 = vmatpush1.msra.mxu0 0.0
    %633 = vmatprep.subr.mxu0 0.0
    %634 = vmatpush1.msra.mxu0 0.0
    %635 = vmatprep.subr.mxu0 0.0
    %636 = vmatpush1.msra.mxu0 0.0
    %637 = vmatprep.subr.mxu0 0.0
    %638 = vmatpush1.msra.mxu0 0.0
    %639 = vmatprep.subr.mxu0 0.0
    %640 = vmatpush1.msra.mxu0 0.0
    %641 = vmatprep.subr.mxu0 0.0
    %642 = vmatpush1.msra.mxu0 0.0
    %643 = vmatprep.subr.mxu0 0.0
    %644 = vmatpush1.msra.mxu0 0.0
    %645 = vmatprep.subr.mxu0 0.0
    %646 = vmatpush1.msra.mxu0 0.0
    %647 = vmatprep.subr.mxu0 0.0
    %648 = vmatpush1.msra.mxu0 0.0
    %649 = vmatprep.subr.mxu0 0.0
    %650 = vmatpush1.msra.mxu0 0.0
    %651 = vmatprep.mubr.f32.mxu0 0.0
    %652 = vmatmul.mubr.f32.gmra.mrb[0].mxu0 %v585
    %v653 = vpop.f32.mrb[0].mxu0
    %v654 = vadd.f32 0.0, %v653
    %v655 = vpop.f32.mrb[0].mxu0
    %656 = vdwg.mxu0
    %657 = vrot.lane.b32.xlu0 %v151, 112
    %v658 = vpop.permute.xlu0 %657
    %659 = vrot.lane.b32.xlu0 %v151, 80
    %v660 = vpop.permute.xlu0 %659
    %v661 = vsel %vm157, %v658, 0
    %v663 = vsel %vm157, %v660, 0
    %665 = vmatprep.subr.mxu0 0.0
    %666 = vmatpush1.xpose.msra.mxu0 %v663
    %667 = vmatprep.subr.mxu0 0.0
    %668 = vmatpush1.xpose.msra.mxu0 0.0
    %669 = vmatprep.subr.mxu0 0.0
    %670 = vmatpush1.xpose.msra.mxu0 0.0
    %671 = vmatprep.subr.mxu0 0.0
    %672 = vmatpush1.xpose.msra.mxu0 0.0
    %673 = vmatprep.subr.mxu0 0.0
    %674 = vmatpush1.xpose.msra.mxu0 0.0
    %675 = vmatprep.subr.mxu0 0.0
    %676 = vmatpush1.xpose.msra.mxu0 0.0
    %677 = vmatprep.subr.mxu0 0.0
    %678 = vmatpush1.xpose.msra.mxu0 0.0
    %679 = vmatprep.subr.mxu0 0.0
    %680 = vmatpush1.xpose.msra.mxu0 0.0
    %681 = vmatprep.subr.mxu0 0.0
    %682 = vmatpush1.xpose.msra.mxu0 0.0
    %683 = vmatprep.subr.mxu0 0.0
    %684 = vmatpush1.xpose.msra.mxu0 0.0
    %685 = vmatprep.subr.mxu0 0.0
    %686 = vmatpush1.xpose.msra.mxu0 0.0
    %687 = vmatprep.subr.mxu0 0.0
    %688 = vmatpush1.xpose.msra.mxu0 0.0
    %689 = vmatprep.subr.mxu0 0.0
    %690 = vmatpush1.xpose.msra.mxu0 0.0
    %691 = vmatprep.subr.mxu0 0.0
    %692 = vmatpush1.xpose.msra.mxu0 0.0
    %693 = vmatprep.subr.mxu0 0.0
    %694 = vmatpush1.xpose.msra.mxu0 0.0
    %695 = vmatprep.subr.mxu0 0.0
    %696 = vmatpush1.xpose.msra.mxu0 0.0
    %697 = vmatprep.subr.mxu0 0.0
    %698 = vmatpush1.xpose.msra.mxu0 0.0
    %699 = vmatprep.subr.mxu0 0.0
    %700 = vmatpush1.xpose.msra.mxu0 0.0
    %701 = vmatprep.subr.mxu0 0.0
    %702 = vmatpush1.xpose.msra.mxu0 0.0
    %703 = vmatprep.subr.mxu0 0.0
    %704 = vmatpush1.xpose.msra.mxu0 0.0
    %705 = vmatprep.subr.mxu0 0.0
    %706 = vmatpush1.xpose.msra.mxu0 0.0
    %707 = vmatprep.subr.mxu0 0.0
    %708 = vmatpush1.xpose.msra.mxu0 0.0
    %709 = vmatprep.subr.mxu0 0.0
    %710 = vmatpush1.xpose.msra.mxu0 0.0
    %711 = vmatprep.subr.mxu0 0.0
    %712 = vmatpush1.xpose.msra.mxu0 0.0
    %713 = vmatprep.subr.mxu0 0.0
    %714 = vmatpush1.xpose.msra.mxu0 0.0
    %715 = vmatprep.subr.mxu0 0.0
    %716 = vmatpush1.xpose.msra.mxu0 0.0
    %717 = vmatprep.subr.mxu0 0.0
    %718 = vmatpush1.xpose.msra.mxu0 0.0
    %719 = vmatprep.subr.mxu0 0.0
    %720 = vmatpush1.xpose.msra.mxu0 0.0
    %721 = vmatprep.subr.mxu0 0.0
    %722 = vmatpush1.xpose.msra.mxu0 0.0
    %723 = vmatprep.subr.mxu0 0.0
    %724 = vmatpush1.xpose.msra.mxu0 0.0
    %725 = vmatprep.subr.mxu0 0.0
    %726 = vmatpush1.xpose.msra.mxu0 0.0
    %727 = vmatprep.subr.mxu0 0.0
    %728 = vmatpush1.xpose.msra.mxu0 0.0
    %729 = vmatprep.mubr.f32.mxu0 0.0
    %730 = vmatmul.mubr.f32.gmra.mrb[0].mxu0 %v661
    %v731 = vpop.f32.mrb[0].mxu0
    %v732 = vadd.f32 0.0, %v731
    %v733 = vpop.f32.mrb[0].mxu0
    %734 = vdwg.mxu0
    %v735 = vmul.f32 %v732, 0.25
    %v736 = vsel %vm233, %v735, -inf
    %737 = vmax.xlane.f32.xlu0 %v736
    %v738 = vpop.xlane.xlu0 %737
    %v739 = vsub.f32 %v735, %v738
    %v740 = vmul.f32 %v739, 1.442695
    %v741 = vpow.pop %v740
    %v742 = vsel %vm233, %v741, 0.0
    %743 = vadd.xlane.f32.xlu0 %v742
    %v744 = vpop.xlane.xlu0 %743
    %v745 = vrcp.pop %v744
    %v746 = vmul.f32 %v741, %v745
    %747 = vrot.lane.b32.xlu0 %v151, 48
    %v748 = vpop.permute.xlu0 %747
    %v751 = vsel %vm233, %v746, 0
    %753 = vmatprep.subr.mxu0 0.0
    %754 = vmatpush1.msra.mxu0 %v748
    %755 = vmatprep.subr.mxu0 0.0
    %756 = vmatpush1.msra.mxu0 0.0
    %757 = vmatprep.subr.mxu0 0.0
    %758 = vmatpush1.msra.mxu0 0.0
    %759 = vmatprep.subr.mxu0 0.0
    %760 = vmatpush1.msra.mxu0 0.0
    %761 = vmatprep.subr.mxu0 0.0
    %762 = vmatpush1.msra.mxu0 0.0
    %763 = vmatprep.subr.mxu0 0.0
    %764 = vmatpush1.msra.mxu0 0.0
    %765 = vmatprep.subr.mxu0 0.0
    %766 = vmatpush1.msra.mxu0 0.0
    %767 = vmatprep.subr.mxu0 0.0
    %768 = vmatpush1.msra.mxu0 0.0
    %769 = vmatprep.subr.mxu0 0.0
    %770 = vmatpush1.msra.mxu0 0.0
    %771 = vmatprep.subr.mxu0 0.0
    %772 = vmatpush1.msra.mxu0 0.0
    %773 = vmatprep.subr.mxu0 0.0
    %774 = vmatpush1.msra.mxu0 0.0
    %775 = vmatprep.subr.mxu0 0.0
    %776 = vmatpush1.msra.mxu0 0.0
    %777 = vmatprep.subr.mxu0 0.0
    %778 = vmatpush1.msra.mxu0 0.0
    %779 = vmatprep.subr.mxu0 0.0
    %780 = vmatpush1.msra.mxu0 0.0
    %781 = vmatprep.subr.mxu0 0.0
    %782 = vmatpush1.msra.mxu0 0.0
    %783 = vmatprep.subr.mxu0 0.0
    %784 = vmatpush1.msra.mxu0 0.0
    %785 = vmatprep.subr.mxu0 0.0
    %786 = vmatpush1.msra.mxu0 0.0
    %787 = vmatprep.subr.mxu0 0.0
    %788 = vmatpush1.msra.mxu0 0.0
    %789 = vmatprep.subr.mxu0 0.0
    %790 = vmatpush1.msra.mxu0 0.0
    %791 = vmatprep.subr.mxu0 0.0
    %792 = vmatpush1.msra.mxu0 0.0
    %793 = vmatprep.subr.mxu0 0.0
    %794 = vmatpush1.msra.mxu0 0.0
    %795 = vmatprep.subr.mxu0 0.0
    %796 = vmatpush1.msra.mxu0 0.0
    %797 = vmatprep.subr.mxu0 0.0
    %798 = vmatpush1.msra.mxu0 0.0
    %799 = vmatprep.subr.mxu0 0.0
    %800 = vmatpush1.msra.mxu0 0.0
    %801 = vmatprep.subr.mxu0 0.0
    %802 = vmatpush1.msra.mxu0 0.0
    %803 = vmatprep.subr.mxu0 0.0
    %804 = vmatpush1.msra.mxu0 0.0
    %805 = vmatprep.subr.mxu0 0.0
    %806 = vmatpush1.msra.mxu0 0.0
    %807 = vmatprep.subr.mxu0 0.0
    %808 = vmatpush1.msra.mxu0 0.0
    %809 = vmatprep.subr.mxu0 0.0
    %810 = vmatpush1.msra.mxu0 0.0
    %811 = vmatprep.subr.mxu0 0.0
    %812 = vmatpush1.msra.mxu0 0.0
    %813 = vmatprep.subr.mxu0 0.0
    %814 = vmatpush1.msra.mxu0 0.0
    %815 = vmatprep.subr.mxu0 0.0
    %816 = vmatpush1.msra.mxu0 0.0
    %817 = vmatprep.mubr.f32.mxu0 0.0
    %818 = vmatmul.mubr.f32.gmra.mrb[0].mxu0 %v751
    %v819 = vpop.f32.mrb[0].mxu0
    %v820 = vadd.f32 0.0, %v819
    %v821 = vpop.f32.mrb[0].mxu0
    %822 = vdwg.mxu0
    %824 = vrot.lane.b32.xlu0 %v820, 16
    %v825 = vpop.permute.xlu0 %824
    %v827 = vsel %vm157, %v654, %v825
    %v828 = vld [vmem:[%s3] sm:$0xff]
    %v829 = vld [vmem:[%s3 + $0x8] sm:$0xff]
    %v830 = vld [vmem:[%s3 + $0x10] sm:$0xff]
    %v831 = vld [vmem:[%s3 + $0x18] sm:$0xff]
    %v832 = vld [vmem:[%s4] sm:$0x1]
    %v834 = vlaneseq
    %v835 = vshrl.u32 %v834, 7
    %v836 = vsub.s32 0, %v835
    %v837 = vrot.slane %v832, %v836
    %v840 = vsel %vm72, %v491, 0
    %v843 = vsel %vm72, %v827, 0
    %845 = vmatprep.subr.mxu0 0.0
    %846 = vmatpush1.msra.mxu0 %v828
    %847 = vmatprep.subr.mxu0 0.0
    %848 = vmatpush1.msra.mxu0 %v829
    %849 = vmatprep.subr.mxu0 0.0
    %850 = vmatpush1.msra.mxu0 %v830
    %851 = vmatprep.subr.mxu0 0.0
    %852 = vmatpush1.msra.mxu0 %v831
    %853 = vmatprep.subr.mxu0 0.0
    %854 = vmatpush1.msra.mxu0 0.0
    %855 = vmatprep.subr.mxu0 0.0
    %856 = vmatpush1.msra.mxu0 0.0
    %857 = vmatprep.subr.mxu0 0.0
    %858 = vmatpush1.msra.mxu0 0.0
    %859 = vmatprep.subr.mxu0 0.0
    %860 = vmatpush1.msra.mxu0 0.0
    %861 = vmatprep.subr.mxu0 0.0
    %862 = vmatpush1.msra.mxu0 0.0
    %863 = vmatprep.subr.mxu0 0.0
    %864 = vmatpush1.msra.mxu0 0.0
    %865 = vmatprep.subr.mxu0 0.0
    %866 = vmatpush1.msra.mxu0 0.0
    %867 = vmatprep.subr.mxu0 0.0
    %868 = vmatpush1.msra.mxu0 0.0
    %869 = vmatprep.subr.mxu0 0.0
    %870 = vmatpush1.msra.mxu0 0.0
    %871 = vmatprep.subr.mxu0 0.0
    %872 = vmatpush1.msra.mxu0 0.0
    %873 = vmatprep.subr.mxu0 0.0
    %874 = vmatpush1.msra.mxu0 0.0
    %875 = vmatprep.subr.mxu0 0.0
    %876 = vmatpush1.msra.mxu0 0.0
    %877 = vmatprep.subr.mxu0 0.0
    %878 = vmatpush1.msra.mxu0 0.0
    %879 = vmatprep.subr.mxu0 0.0
    %880 = vmatpush1.msra.mxu0 0.0
    %881 = vmatprep.subr.mxu0 0.0
    %882 = vmatpush1.msra.mxu0 0.0
    %883 = vmatprep.subr.mxu0 0.0
    %884 = vmatpush1.msra.mxu0 0.0
    %885 = vmatprep.subr.mxu0 0.0
    %886 = vmatpush1.msra.mxu0 0.0
    %887 = vmatprep.subr.mxu0 0.0
    %888 = vmatpush1.msra.mxu0 0.0
    %889 = vmatprep.subr.mxu0 0.0
    %890 = vmatpush1.msra.mxu0 0.0
    %891 = vmatprep.subr.mxu0 0.0
    %892 = vmatpush1.msra.mxu0 0.0
    %893 = vmatprep.subr.mxu0 0.0
    %894 = vmatpush1.msra.mxu0 0.0
    %895 = vmatprep.subr.mxu0 0.0
    %896 = vmatpush1.msra.mxu0 0.0
    %897 = vmatprep.subr.mxu0 0.0
    %898 = vmatpush1.msra.mxu0 0.0
    %899 = vmatprep.subr.mxu0 0.0
    %900 = vmatpush1.msra.mxu0 0.0
    %901 = vmatprep.subr.mxu0 0.0
    %902 = vmatpush1.msra.mxu0 0.0
    %903 = vmatprep.subr.mxu0 0.0
    %904 = vmatpush1.msra.mxu0 0.0
    %905 = vmatprep.subr.mxu0 0.0
    %906 = vmatpush1.msra.mxu0 0.0
    %907 = vmatprep.subr.mxu0 0.0
    %908 = vmatpush1.msra.mxu0 0.0
    %909 = vmatprep.mubr.f32.mxu0 0.0
    %910 = vmatmul.mubr.f32.gmra.mrb[0].mxu0 %v840
    %v911 = vpop.f32.mrb[0].mxu0
    %v912 = vadd.f32 %v837, %v911
    %v913 = vpop.f32.mrb[0].mxu0
    %914 = vmatprep.mubr.f32.mxu0 0.0
    %915 = vmatmul.mubr.f32.gmra.mrb[0].mxu0 %v843
    %v916 = vpop.f32.mrb[0].mxu0
    %v917 = vadd.f32 %v837, %v916
    %v918 = vpop.f32.mrb[0].mxu0
    %919 = vdwg.mxu0
    %v920 = vadd.f32 %v59, %v912
    %v921 = vadd.f32 %v60, %v917
    %v922 = vld [vmem:[%s9] sm:$0x1]
    %v923 = vld [vmem:[%s10] sm:$0x1]
    %v924 = vsel %vm72, %v920, 0.0
    %925 = vadd.xlane.f32.xlu0 %v924
    %v926 = vpop.xlane.xlu0 %925
    %v927 = vsel %vm72, %v921, 0.0
    %928 = vadd.xlane.f32.xlu0 %v927
    %v929 = vpop.xlane.xlu0 %928
    %v930 = vrcp.pop 32.0
    %v931 = vmul.f32 %v926, %v930
    %v932 = vmul.f32 %v929, %v930
    %v933 = vsub.f32 %v920, %v931
    %v934 = vsub.f32 %v921, %v932
    %v935 = vmul.f32 %v933, %v933
    %v936 = vmul.f32 %v934, %v934
    %v937 = vsel %vm72, %v935, 0.0
    %938 = vadd.xlane.f32.xlu0 %v937
    %v939 = vpop.xlane.xlu0 %938
    %v940 = vsel %vm72, %v936, 0.0
    %941 = vadd.xlane.f32.xlu0 %v940
    %v942 = vpop.xlane.xlu0 %941
    %v943 = vmul.f32 %v939, %v930
    %v944 = vmul.f32 %v942, %v930
    %v945 = vadd.f32 %v943, 1e-05
    %v946 = vadd.f32 %v944, 1e-05
    %v947 = vrsqrt.pop %v945
    %v948 = vrsqrt.pop %v946
    %v949 = vmul.f32 %v933, %v947
    %v950 = vmul.f32 %v934, %v948
    %v952 = vlaneseq
    %v953 = vshrl.u32 %v952, 7
    %v954 = vsub.s32 0, %v953
    %v955 = vrot.slane %v922, %v954
    %v957 = vmul.f32 %v949, %v955
    %v958 = vmul.f32 %v950, %v955
    %v960 = vlaneseq
    %v961 = vshrl.u32 %v960, 7
    %v962 = vsub.s32 0, %v961
    %v963 = vrot.slane %v923, %v962
    %v965 = vadd.f32 %v957, %v963
    %v966 = vadd.f32 %v958, %v963
    %v967 = vld [vmem:[%s5] sm:$0xff]
    %v968 = vld [vmem:[%s5 + $0x8] sm:$0xff]
    %v969 = vld [vmem:[%s5 + $0x10] sm:$0xff]
    %v970 = vld [vmem:[%s5 + $0x18] sm:$0xff]
    %v971 = vld [vmem:[%s6] sm:$0x1]
    %v973 = vlaneseq
    %v974 = vshrl.u32 %v973, 7
    %v975 = vsub.s32 0, %v974
    %v976 = vrot.slane %v971, %v975
    %v979 = vsel %vm72, %v965, 0
    %v982 = vsel %vm72, %v966, 0
    %984 = vmatprep.subr.mxu0 0.0
    %985 = vmatpush1.msra.mxu0 %v967
    %986 = vmatprep.subr.mxu0 0.0
    %987 = vmatpush1.msra.mxu0 %v968
    %988 = vmatprep.subr.mxu0 0.0
    %989 = vmatpush1.msra.mxu0 %v969
    %990 = vmatprep.subr.mxu0 0.0
    %991 = vmatpush1.msra.mxu0 %v970
    %992 = vmatprep.subr.mxu0 0.0
    %993 = vmatpush1.msra.mxu0 0.0
    %994 = vmatprep.subr.mxu0 0.0
    %995 = vmatpush1.msra.mxu0 0.0
    %996 = vmatprep.subr.mxu0 0.0
    %997 = vmatpush1.msra.mxu0 0.0
    %998 = vmatprep.subr.mxu0 0.0
    %999 = vmatpush1.msra.mxu0 0.0
    %1000 = vmatprep.subr.mxu0 0.0
    %1001 = vmatpush1.msra.mxu0 0.0
    %1002 = vmatprep.subr.mxu0 0.0
    %1003 = vmatpush1.msra.mxu0 0.0
    %1004 = vmatprep.subr.mxu0 0.0
    %1005 = vmatpush1.msra.mxu0 0.0
    %1006 = vmatprep.subr.mxu0 0.0
    %1007 = vmatpush1.msra.mxu0 0.0
    %1008 = vmatprep.subr.mxu0 0.0
    %1009 = vmatpush1.msra.mxu0 0.0
    %1010 = vmatprep.subr.mxu0 0.0
    %1011 = vmatpush1.msra.mxu0 0.0
    %1012 = vmatprep.subr.mxu0 0.0
    %1013 = vmatpush1.msra.mxu0 0.0
    %1014 = vmatprep.subr.mxu0 0.0
    %1015 = vmatpush1.msra.mxu0 0.0
    %1016 = vmatprep.subr.mxu0 0.0
    %1017 = vmatpush1.msra.mxu0 0.0
    %1018 = vmatprep.subr.mxu0 0.0
    %1019 = vmatpush1.msra.mxu0 0.0
    %1020 = vmatprep.subr.mxu0 0.0
    %1021 = vmatpush1.msra.mxu0 0.0
    %1022 = vmatprep.subr.mxu0 0.0
    %1023 = vmatpush1.msra.mxu0 0.0
    %1024 = vmatprep.subr.mxu0 0.0
    %1025 = vmatpush1.msra.mxu0 0.0
    %1026 = vmatprep.subr.mxu0 0.0
    %1027 = vmatpush1.msra.mxu0 0.0
    %1028 = vmatprep.subr.mxu0 0.0
    %1029 = vmatpush1.msra.mxu0 0.0
    %1030 = vmatprep.subr.mxu0 0.0
    %1031 = vmatpush1.msra.mxu0 0.0
    %1032 = vmatprep.subr.mxu0 0.0
    %1033 = vmatpush1.msra.mxu0 0.0
    %1034 = vmatprep.subr.mxu0 0.0
    %1035 = vmatpush1.msra.mxu0 0.0
    %1036 = vmatprep.subr.mxu0 0.0
    %1037 = vmatpush1.msra.mxu0 0.0
    %1038 = vmatprep.subr.mxu0 0.0
    %1039 = vmatpush1.msra.mxu0 0.0
    %1040 = vmatprep.subr.mxu0 0.0
    %1041 = vmatpush1.msra.mxu0 0.0
    %1042 = vmatprep.subr.mxu0 0.0
    %1043 = vmatpush1.msra.mxu0 0.0
    %1044 = vmatprep.subr.mxu0 0.0
    %1045 = vmatpush1.msra.mxu0 0.0
    %1046 = vmatprep.subr.mxu0 0.0
    %1047 = vmatpush1.msra.mxu0 0.0
    %1048 = vmatprep.mubr.f32.mxu0 0.0
    %1049 = vmatmul.mubr.f32.gmra.mrb[0].mxu0 %v979
    %v1050 = vpop.f32.mrb[0].mxu0
    %v1051 = vadd.f32 %v976, %v1050
    %v1052 = vpop.f32.mrb[0].mxu0
    %1053 = vmatprep.mubr.f32.mxu0 0.0
    %1054 = vmatmul.mubr.f32.gmra.mrb[0].mxu0 %v982
    %v1055 = vpop.f32.mrb[0].mxu0
    %v1056 = vadd.f32 %v976, %v1055
    %v1057 = vpop.f32.mrb[0].mxu0
    %1058 = vdwg.mxu0
    %v1059 = vmax.f32 %v1051, 0.0
    %v1060 = vmax.f32 %v1056, 0.0
    %v1061 = vld [vmem:[%s7] sm:$0xff]
    %v1062 = vld [vmem:[%s7 + $0x8] sm:$0xff]
    %v1063 = vld [vmem:[%s7 + $0x10] sm:$0xff]
    %v1064 = vld [vmem:[%s7 + $0x18] sm:$0xff]
    %v1065 = vld [vmem:[%s7 + $0x20] sm:$0xff]
    %v1066 = vld [vmem:[%s7 + $0x28] sm:$0xff]
    %v1067 = vld [vmem:[%s7 + $0x30] sm:$0xff]
    %v1068 = vld [vmem:[%s7 + $0x38] sm:$0xff]
    %v1069 = vld [vmem:[%s8] sm:$0x1]
    %v1071 = vlaneseq
    %v1072 = vshrl.u32 %v1071, 7
    %v1073 = vsub.s32 0, %v1072
    %v1074 = vrot.slane %v1069, %v1073
    %vm1076 = vcmask 523264
    %v1078 = vsel %vm1076, %v1059, 0
    %v1081 = vsel %vm1076, %v1060, 0
    %1083 = vmatprep.subr.mxu0 0.0
    %1084 = vmatpush1.msra.mxu0 %v1061
    %1085 = vmatprep.subr.mxu0 0.0
    %1086 = vmatpush1.msra.mxu0 %v1062
    %1087 = vmatprep.subr.mxu0 0.0
    %1088 = vmatpush1.msra.mxu0 %v1063
    %1089 = vmatprep.subr.mxu0 0.0
    %1090 = vmatpush1.msra.mxu0 %v1064
    %1091 = vmatprep.subr.mxu0 0.0
    %1092 = vmatpush1.msra.mxu0 %v1065
    %1093 = vmatprep.subr.mxu0 0.0
    %1094 = vmatpush1.msra.mxu0 %v1066
    %1095 = vmatprep.subr.mxu0 0.0
    %1096 = vmatpush1.msra.mxu0 %v1067
    %1097 = vmatprep.subr.mxu0 0.0
    %1098 = vmatpush1.msra.mxu0 %v1068
    %1099 = vmatprep.subr.mxu0 0.0
    %1100 = vmatpush1.msra.mxu0 0.0
    %1101 = vmatprep.subr.mxu0 0.0
    %1102 = vmatpush1.msra.mxu0 0.0
    %1103 = vmatprep.subr.mxu0 0.0
    %1104 = vmatpush1.msra.mxu0 0.0
    %1105 = vmatprep.subr.mxu0 0.0
    %1106 = vmatpush1.msra.mxu0 0.0
    %1107 = vmatprep.subr.mxu0 0.0
    %1108 = vmatpush1.msra.mxu0 0.0
    %1109 = vmatprep.subr.mxu0 0.0
    %1110 = vmatpush1.msra.mxu0 0.0
    %1111 = vmatprep.subr.mxu0 0.0
    %1112 = vmatpush1.msra.mxu0 0.0
    %1113 = vmatprep.subr.mxu0 0.0
    %1114 = vmatpush1.msra.mxu0 0.0
    %1115 = vmatprep.subr.mxu0 0.0
    %1116 = vmatpush1.msra.mxu0 0.0
    %1117 = vmatprep.subr.mxu0 0.0
    %1118 = vmatpush1.msra.mxu0 0.0
    %1119 = vmatprep.subr.mxu0 0.0
    %1120 = vmatpush1.msra.mxu0 0.0
    %1121 = vmatprep.subr.mxu0 0.0
    %1122 = vmatpush1.msra.mxu0 0.0
    %1123 = vmatprep.subr.mxu0 0.0
    %1124 = vmatpush1.msra.mxu0 0.0
    %1125 = vmatprep.subr.mxu0 0.0
    %1126 = vmatpush1.msra.mxu0 0.0
    %1127 = vmatprep.subr.mxu0 0.0
    %1128 = vmatpush1.msra.mxu0 0.0
    %1129 = vmatprep.subr.mxu0 0.0
    %1130 = vmatpush1.msra.mxu0 0.0
    %1131 = vmatprep.subr.mxu0 0.0
    %1132 = vmatpush1.msra.mxu0 0.0
    %1133 = vmatprep.subr.mxu0 0.0
    %1134 = vmatpush1.msra.mxu0 0.0
    %1135 = vmatprep.subr.mxu0 0.0
    %1136 = vmatpush1.msra.mxu0 0.0
    %1137 = vmatprep.subr.mxu0 0.0
    %1138 = vmatpush1.msra.mxu0 0.0
    %1139 = vmatprep.subr.mxu0 0.0
    %1140 = vmatpush1.msra.mxu0 0.0
    %1141 = vmatprep.subr.mxu0 0.0
    %1142 = vmatpush1.msra.mxu0 0.0
    %1143 = vmatprep.subr.mxu0 0.0
    %1144 = vmatpush1.msra.mxu0 0.0
    %1145 = vmatprep.subr.mxu0 0.0
    %1146 = vmatpush1.msra.mxu0 0.0
    %1147 = vmatprep.mubr.f32.mxu0 0.0
    %1148 = vmatmul.mubr.f32.gmra.mrb[0].mxu0 %v1078
    %v1149 = vpop.f32.mrb[0].mxu0
    %v1150 = vadd.f32 %v1074, %v1149
    %v1151 = vpop.f32.mrb[0].mxu0
    %1152 = vmatprep.mubr.f32.mxu0 0.0
    %1153 = vmatmul.mubr.f32.gmra.mrb[0].mxu0 %v1081
    %v1154 = vpop.f32.mrb[0].mxu0
    %v1155 = vadd.f32 %v1074, %v1154
    %v1156 = vpop.f32.mrb[0].mxu0
    %1157 = vdwg.mxu0
    %v1158 = vadd.f32 %v965, %v1150
    %v1159 = vadd.f32 %v966, %v1155
    %v1160 = vld [vmem:[%s11] sm:$0x1]
    %v1161 = vld [vmem:[%s12] sm:$0x1]
    %v1162 = vsel %vm72, %v1158, 0.0
    %1163 = vadd.xlane.f32.xlu0 %v1162
    %v1164 = vpop.xlane.xlu0 %1163
    %v1165 = vsel %vm72, %v1159, 0.0
    %1166 = vadd.xlane.f32.xlu0 %v1165
    %v1167 = vpop.xlane.xlu0 %1166
    %v1168 = vmul.f32 %v1164, %v930
    %v1169 = vmul.f32 %v1167, %v930
    %v1170 = vsub.f32 %v1158, %v1168
    %v1171 = vsub.f32 %v1159, %v1169
    %v1172 = vmul.f32 %v1170, %v1170
    %v1173 = vmul.f32 %v1171, %v1171
    %v1174 = vsel %vm72, %v1172, 0.0
    %1175 = vadd.xlane.f32.xlu0 %v1174
    %v1176 = vpop.xlane.xlu0 %1175
    %v1177 = vsel %vm72, %v1173, 0.0
    %1178 = vadd.xlane.f32.xlu0 %v1177
    %v1179 = vpop.xlane.xlu0 %1178
    %v1180 = vmul.f32 %v1176, %v930
    %v1181 = vmul.f32 %v1179, %v930
    %v1182 = vadd.f32 %v1180, 1e-05
    %v1183 = vadd.f32 %v1181, 1e-05
    %v1184 = vrsqrt.pop %v1182
    %v1185 = vrsqrt.pop %v1183
    %v1186 = vmul.f32 %v1170, %v1184
    %v1187 = vmul.f32 %v1171, %v1185
    %v1189 = vlaneseq
    %v1190 = vshrl.u32 %v1189, 7
    %v1191 = vsub.s32 0, %v1190
    %v1192 = vrot.slane %v1160, %v1191
    %v1194 = vmul.f32 %v1186, %v1192
    %v1195 = vmul.f32 %v1187, %v1192
    %v1197 = vlaneseq
    %v1198 = vshrl.u32 %v1197, 7
    %v1199 = vsub.s32 0, %v1198
    %v1200 = vrot.slane %v1161, %v1199
    %v1202 = vadd.f32 %v1194, %v1200
    %v1203 = vadd.f32 %v1195, %v1200
    %1204 = vst.msk [vmem:[#allocation5] sm:$0xff] %vm72, %v1202
    %1205 = vst.msk [vmem:[#allocation5 + $0x8] sm:$0xff] %vm72, %v1203
    // Predicated region
    $region58: #{context_embed_forward.1} parent=1 // pred_check
      _
    $region59: #{context_embed_forward.1} parent=1 // pred_check_branch
      %1207 = sbr.rel (0) target = $region61
    $region60: #{context_embed_forward.1} parent=1 // pred_region
      %s1209 = ssub.s32 256, 256
      %1210 = vsyncadd [#allocation4], %s1209
      %s1211 = sshll.u32 [#allocation5], 4
      %s1212 = int_to_ptr.vmem [resolvable:$true] %s1211
      %1217 = dma.vmem_to_hbm [thread:$0]  %s1212, 256, %s13, [#allocation4], 128, 128, 8
    $region61: #{context_embed_forward.1} parent=1 // pred_fallthru
      _
    // Predicated region
    $region62: #{context_embed_forward.1} parent=1 // pred_check
      _
    $region63: #{context_embed_forward.1} parent=1 // pred_check_branch
      %1219 = sbr.rel (0) target = $region65
    $region64: #{context_embed_forward.1} parent=1 // pred_region
      %1220 = dma.done [#allocation4], 256
    $region65: #{context_embed_forward.1} parent=1 // pred_fallthru
      _
    %1221 = vsyncpa [#allocation3], 1
    %1222 = vsyncpa [#allocation4], 1

</llo_original>
